<compile_context>
chip_gen: v7x
topology: tpu7x:2x2x1
jax: 0.10.0
libtpu: 0.0.40
codegen_flags: <defaults>
</compile_context>

<pallas_src>
import functools
import math

import jax
import jax.numpy as jnp
from jax.experimental import pallas as pl
from jax.experimental.pallas import tpu as pltpu


def _pick_tile(n, candidates):
    for c in candidates:
        if n >= c and n % c == 0:
            return c
    return n


# --------------------------------------------------------------------------
# 1. RoPE cos/sin cache
# --------------------------------------------------------------------------
def _rope_cache_kernel(inv_freq_ref, out_ref):
    ts = out_ref.shape[0]
    half = inv_freq_ref.shape[1]
    base_pos = (pl.program_id(0) * ts).astype(jnp.float32)
    pos = jax.lax.broadcasted_iota(jnp.int32, (ts, half), 0).astype(jnp.float32)
    pos = pos + base_pos
    angles = pos * inv_freq_ref[...]          # (1, half) broadcasts over rows
    c = jnp.cos(angles)                       # only dim/2 transcendentals
    s = jnp.sin(angles)
    # emb = cat(freqs, freqs)  =>  cos = [c|c], sin = [s|s]; one lane-dense slab.
    out_ref[...] = jnp.concatenate([c, c, s, s], axis=-1).astype(out_ref.dtype)


@functools.partial(jax.jit, static_argnames=("dim", "seq_len", "dtype"))
def _rope_cache_pallas(inv_freq_row, *, dim, seq_len, dtype):
    half = dim // 2
    ts = seq_len if seq_len <= 1024 else _pick_tile(
        seq_len, (1024, 512, 256, 128, 64, 32, 16, 8))
    fused = pl.pallas_call(
        _rope_cache_kernel,
        out_shape=jax.ShapeDtypeStruct((seq_len, 2 * dim), dtype),
        grid=(seq_len // ts,),
        # Full-array block, constant block index -> DMA'd once, not per step.
        in_specs=[pl.BlockSpec((1, half), lambda i: (0, 0))],
        out_specs=pl.BlockSpec((ts, 2 * dim), lambda i: (i, 0)),
        compiler_params=pltpu.CompilerParams(dimension_semantics=("arbitrary",)),
    )(inv_freq_row)
    return fused[:, :dim], fused[:, dim:]


# --------------------------------------------------------------------------
# 2. Linear projections (x @ W, weights stored (in, out) == torch W.T)
# --------------------------------------------------------------------------
def _matmul_kernel(x_ref, w_ref, o_ref, acc_ref):
    @pl.when(pl.program_id(2) == 0)
    def _():
        acc_ref[...] = jnp.zeros(acc_ref.shape, dtype=acc_ref.dtype)

    acc_ref[...] += jnp.dot(x_ref[...], w_ref[...],
                            preferred_element_type=jnp.float32)

    # Write back only once per output tile (saves a vst per K step; matters
    # on v5e with a single vector-store slot).
    @pl.when(pl.program_id(2) == pl.num_programs(2) - 1)
    def _():
        o_ref[...] = acc_ref[...].astype(o_ref.dtype)


@jax.jit
def _linear_pallas(x, w):
    """y = x @ w with x:(M,K), w:(K,N)."""
    m, kdim = x.shape
    n = w.shape[1]
    tm = _pick_tile(m, (512, 256, 128))
    tn = _pick_tile(n, (512, 256, 128))
    tk = _pick_tile(kdim, (512, 256, 128))   # tk<=512 keeps v5e under 16 MiB
    return pl.pallas_call(
        _matmul_kernel,
        out_shape=jax.ShapeDtypeStruct((m, n), x.dtype),
        grid=(m // tm, n // tn, kdim // tk),
        in_specs=[pl.BlockSpec((tm, tk), lambda i, j, kk: (i, kk)),
                  pl.BlockSpec((tk, tn), lambda i, j, kk: (kk, j))],
        out_specs=pl.BlockSpec((tm, tn), lambda i, j, kk: (i, j)),
        scratch_shapes=[pltpu.VMEM((tm, tn), jnp.float32)],
        compiler_params=pltpu.CompilerParams(
            dimension_semantics=("parallel", "parallel", "arbitrary")),
    )(x, w)


# --------------------------------------------------------------------------
# 3. Rotary embedding + (B,S,H,D) -> (B,H,S,D) relayout, one pass over q/k/v
# --------------------------------------------------------------------------
def _rope_relayout_kernel(q_ref, k_ref, v_ref, cos_ref, sin_ref,
                          qo_ref, ko_ref, vo_ref, *, use_roll):
    cos = cos_ref[0]                     # (ts, D)
    sin = sin_ref[0]
    d = cos.shape[-1]
    half = d // 2
    n_q_heads = q_ref.shape[2]
    n_kv_heads = k_ref.shape[2]

    if use_roll:
        # rotate_half(x) == roll(x, D/2) * sign, sign folded into sin once.
        lane = jax.lax.broadcasted_iota(jnp.int32, sin.shape, 1)
        sin_eff = jnp.where(lane < half, -sin, sin)

        def rot(x):
            return pltpu.roll(x, shift=half, axis=x.ndim - 1)
    else:
        # Small head_dim (< 128 lanes): stick to the known-good concat lowering.
        sin_eff = sin

        def rot(x):
            return jnp.concatenate([-x[..., half:], x[..., :half]], axis=-1)

    cos_b = cos[:, None, :]              # broadcast over heads
    sin_b = sin_eff[:, None, :]

    q = q_ref[0]                         # (ts, Hq, D)
    q_rot = (q * cos_b + rot(q) * sin_b).astype(qo_ref.dtype)
    for h in range(n_q_heads):           # static, unrolled: per-head relayout
        qo_ref[0, h] = q_rot[:, h, :]

    k = k_ref[0]                         # (ts, Hkv, D)
    k_rot = (k * cos_b + rot(k) * sin_b).astype(ko_ref.dtype)
    v = v_ref[0]
    for h in range(n_kv_heads):
        ko_ref[0, h] = k_rot[:, h, :]
        vo_ref[0, h] = v[:, h, :].astype(vo_ref.dtype)


@jax.jit
def _rope_and_relayout_pallas(q, k, v, cos_g, sin_g):
    """q,k,v: (B, S, H, D) projection layout; cos/sin: (B, S, D) (gathered).
    Returns q,k,v in (B, H, S, D) attention layout with RoPE applied to q,k."""
    b, s, hq, d = q.shape
    hkv = k.shape[2]
    ts = _pick_tile(s, (128, 64, 32, 16, 8))
    use_roll = (d % 128 == 0)
    kernel = functools.partial(_rope_relayout_kernel, use_roll=use_roll)
    return pl.pallas_call(
        kernel,
        out_shape=(jax.ShapeDtypeStruct((b, hq, s, d), q.dtype),
                   jax.ShapeDtypeStruct((b, hkv, s, d), k.dtype),
                   jax.ShapeDtypeStruct((b, hkv, s, d), v.dtype)),
        grid=(b, s // ts),
        in_specs=[pl.BlockSpec((1, ts, hq, d), lambda bi, si: (bi, si, 0, 0)),
                  pl.BlockSpec((1, ts, hkv, d), lambda bi, si: (bi, si, 0, 0)),
                  pl.BlockSpec((1, ts, hkv, d), lambda bi, si: (bi, si, 0, 0)),
                  pl.BlockSpec((1, ts, d), lambda bi, si: (bi, si, 0)),
                  pl.BlockSpec((1, ts, d), lambda bi, si: (bi, si, 0))],
        out_specs=(pl.BlockSpec((1, hq, ts, d), lambda bi, si: (bi, 0, si, 0)),
                   pl.BlockSpec((1, hkv, ts, d), lambda bi, si: (bi, 0, si, 0)),
                   pl.BlockSpec((1, hkv, ts, d), lambda bi, si: (bi, 0, si, 0))),
        compiler_params=pltpu.CompilerParams(
            dimension_semantics=("parallel", "parallel")),
    )(q, k, v, cos_g, sin_g)


# --------------------------------------------------------------------------
# 4. Flash attention (online softmax, GQA group per step, optional mask)
# --------------------------------------------------------------------------
def _flash_attention_kernel(*refs, scale, has_mask):
    if has_mask:
        q_ref, k_ref, v_ref, mask_ref, o_ref, m_sc, l_sc, acc_sc = refs
    else:
        q_ref, k_ref, v_ref, o_ref, m_sc, l_sc, acc_sc = refs
        mask_ref = None

    kv_i = pl.program_id(3)

    @pl.when(kv_i == 0)
    def _():
        m_sc[...] = jnp.full(m_sc.shape, -jnp.inf, dtype=m_sc.dtype)
        l_sc[...] = jnp.zeros(l_sc.shape, dtype=l_sc.dtype)
        acc_sc[...] = jnp.zeros(acc_sc.shape, dtype=acc_sc.dtype)

    grp, tq, d = q_ref.shape[1], q_ref.shape[2], q_ref.shape[3]
    k = k_ref[0, 0]                               # (tkv, D), native dtype
    v = v_ref[0, 0]                               # (tkv, D), native dtype
    tkv = k.shape[0]

    # Fold softmax scale into q: O(G*tq*D) instead of O(G*tq*tkv).
    q = (q_ref[0] * scale).reshape(grp * tq, d)   # (G*tq, D), native dtype

    s = jax.lax.dot_general(q, k, (((1,), (1,)), ((), ())),
                            preferred_element_type=jnp.float32)  # (G*tq, tkv)
    if has_mask:
        m_add = mask_ref[0, 0].astype(jnp.float32)               # (tq, tkv)
        s = (s.reshape(grp, tq, tkv) + m_add[None, :, :]).reshape(grp * tq, tkv)

    m_prev = m_sc[...]                                           # (G*tq, 1)
    m_new = jnp.maximum(m_prev, jnp.max(s, axis=-1, keepdims=True))
    alpha = jnp.exp(m_prev - m_new)
    p = jnp.exp(s - m_new)
    l_sc[...] = alpha * l_sc[...] + jnp.sum(p, axis=-1, keepdims=True)
    acc_sc[...] = alpha * acc_sc[...] + jnp.dot(
        p.astype(v.dtype), v, preferred_element_type=jnp.float32)
    m_sc[...] = m_new

    @pl.when(kv_i == pl.num_programs(3) - 1)
    def _():
        inv_l = pl.reciprocal(l_sc[...], approx=True)
        o_ref[0] = (acc_sc[...] * inv_l).reshape(grp, tq, d).astype(o_ref.dtype)


@functools.partial(jax.jit, static_argnames=("n_rep", "scale", "has_mask"))
def _flash_attention_pallas(q, k, v, mask, *, n_rep, scale, has_mask):
    """q: (B,Hq,Sq,D), k/v: (B,Hkv,Skv,D), mask: (B,1,Sq,Skv) or None."""
    b, hq, sq, d = q.shape
    hkv, skv = k.shape[1], k.shape[2]
    grp = n_rep
    tq = _pick_tile(sq, (256, 128, 64, 32, 16, 8))
    tkv = _pick_tile(skv, (512, 256, 128, 64, 32, 16, 8))

    kernel = functools.partial(_flash_attention_kernel, scale=scale,
                               has_mask=has_mask)
    in_specs = [
        pl.BlockSpec((1, grp, tq, d), lambda bi, gi, qi, ki: (bi, gi, qi, 0)),
        # repeat_kv via index_map: group gi reads KV head gi once per step.
        pl.BlockSpec((1, 1, tkv, d), lambda bi, gi, qi, ki: (bi, gi, ki, 0)),
        pl.BlockSpec((1, 1, tkv, d), lambda bi, gi, qi, ki: (bi, gi, ki, 0)),
    ]
    args = [q, k, v]
    if has_mask:
        in_specs.append(
            pl.BlockSpec((1, 1, tq, tkv), lambda bi, gi, qi, ki: (bi, 0, qi, ki)))
        args.append(mask)

    return pl.pallas_call(
        kernel,
        out_shape=jax.ShapeDtypeStruct((b, hq, sq, d), q.dtype),
        grid=(b, hkv, sq // tq, skv // tkv),
        in_specs=in_specs,
        out_specs=pl.BlockSpec((1, grp, tq, d),
                               lambda bi, gi, qi, ki: (bi, gi, qi, 0)),
        scratch_shapes=[pltpu.VMEM((grp * tq, 1), jnp.float32),
                        pltpu.VMEM((grp * tq, 1), jnp.float32),
                        pltpu.VMEM((grp * tq, d), jnp.float32)],
        compiler_params=pltpu.CompilerParams(
            dimension_semantics=("parallel", "parallel", "parallel",
                                 "arbitrary")),
    )(*args)


# --------------------------------------------------------------------------
# Module wrappers (mirror the PyTorch classes)
# --------------------------------------------------------------------------
class LlamaConfig:
    def __init__(self, hidden_size=32, num_attention_heads=4,
                 num_key_value_heads=2, max_position_embeddings=64,
                 rope_scaling=None, pretraining_tp=1):
        self.hidden_size = hidden_size
        self.num_attention_heads = num_attention_heads
        self.num_key_value_heads = num_key_value_heads
        self.max_position_embeddings = max_position_embeddings
        self.rope_scaling = rope_scaling
        self.pretraining_tp = pretraining_tp


class LlamaRotaryEmbedding:
    """Plain / linear-scaling / dynamic-NTK variants through (base, inv_freq)
    reparameterisation; cache built by a Pallas kernel."""

    def __init__(self, dim, max_position_embeddings=2048, base=10000,
                 scaling_type=None, scaling_factor=1.0):
        self.dim = dim
        self.max_position_embeddings = max_position_embeddings
        self.base = float(base)
        self.scaling_type = scaling_type
        self.scaling_factor = float(scaling_factor)
        self._set_cos_sin_cache(max_position_embeddings)

    def _set_cos_sin_cache(self, seq_len):
        self.max_seq_len_cached = seq_len
        base = self.base
        if (self.scaling_type == "dynamic"
                and seq_len > self.max_position_embeddings):
            base = self.base * (
                self.scaling_factor * seq_len / self.max_position_embeddings
                - (self.scaling_factor - 1.0)) ** (self.dim / (self.dim - 2))
        inv_freq = 1.0 / (jnp.asarray(base, jnp.float32)
                          ** (jnp.arange(0, self.dim, 2, dtype=jnp.float32)
                              / self.dim))
        if self.scaling_type == "linear":
            inv_freq = inv_freq / self.scaling_factor   # (t/f)*w == t*(w/f)
        cos, sin = _rope_cache_pallas(inv_freq[None, :], dim=self.dim,
                                      seq_len=seq_len, dtype=jnp.float32)
        self.cos_cached = cos[None, None, :, :]   # (1, 1, seq, dim), f32
        self.sin_cached = sin[None, None, :, :]

    def __call__(self, x, seq_len=None):
        if seq_len > self.max_seq_len_cached:
            self._set_cos_sin_cache(seq_len)
        return (self.cos_cached[:, :, :seq_len, :].astype(x.dtype),
                self.sin_cached[:, :, :seq_len, :].astype(x.dtype))


class LlamaAttention:
    def __init__(self, config, key):
        self.config = config
        self.hidden_size = config.hidden_size
        self.num_heads = config.num_attention_heads
        self.head_dim = self.hidden_size // self.num_heads
        self.num_key_value_heads = config.num_key_value_heads
        self.num_key_value_groups = self.num_heads // self.num_key_value_heads
        self.max_position_embeddings = config.max_position_embeddings
        if self.head_dim * self.num_heads != self.hidden_size:
            raise ValueError("hidden_size must be divisible by num_heads")
        kq, kk, kv, ko = jax.random.split(key, 4)
        scale = 1.0 / math.sqrt(self.hidden_size)
        # Weights stored (in, out) so kernels compute x @ W  (== torch x @ W.T).
        self.q_w = scale * jax.random.normal(
            kq, (self.hidden_size, self.num_heads * self.head_dim), jnp.float32)
        self.k_w = scale * jax.random.normal(
            kk, (self.hidden_size, self.num_key_value_heads * self.head_dim),
            jnp.float32)
        self.v_w = scale * jax.random.normal(
            kv, (self.hidden_size, self.num_key_value_heads * self.head_dim),
            jnp.float32)
        self.o_w = scale * jax.random.normal(
            ko, (self.num_heads * self.head_dim, self.hidden_size), jnp.float32)
        # Fused QKV weight: x2d is read from HBM once for all three projections.
        self.qkv_w = jnp.concatenate([self.q_w, self.k_w, self.v_w], axis=1)
        rs = config.rope_scaling
        if rs is None:
            self.rotary_emb = LlamaRotaryEmbedding(
                self.head_dim, self.max_position_embeddings)
        else:
            self.rotary_emb = LlamaRotaryEmbedding(
                self.head_dim, self.max_position_embeddings,
                scaling_type=rs["type"], scaling_factor=rs["factor"])

    def __call__(self, hidden_states, attention_mask=None, position_ids=None,
                 past_key_value=None, output_attentions=False, use_cache=False):
        # TODO(synk): pretraining_tp > 1 weight-sliced projections are
        # mathematically identical to the tp=1 matmul and are not replicated.
        bsz, q_len, _ = hidden_states.shape
        x2d = hidden_states.reshape(bsz * q_len, self.hidden_size)

        q_dim = self.num_heads * self.head_dim
        kv_dim = self.num_key_value_heads * self.head_dim
        qkv = _linear_pallas(x2d, self.qkv_w)       # one fused GEMM
        q = qkv[:, :q_dim].reshape(bsz, q_len, self.num_heads, self.head_dim)
        k = qkv[:, q_dim:q_dim + kv_dim].reshape(
            bsz, q_len, self.num_key_value_heads, self.head_dim)
        v = qkv[:, q_dim + kv_dim:].reshape(
            bsz, q_len, self.num_key_value_heads, self.head_dim)

        kv_seq_len = q_len
        if past_key_value is not None:
            kv_seq_len += past_key_value[0].shape[2]
        cos, sin = self.rotary_emb(v, seq_len=kv_seq_len)

        if position_ids is None:
            position_ids = jnp.broadcast_to(
                jnp.arange(kv_seq_len - q_len, kv_seq_len, dtype=jnp.int32)[None, :],
                (bsz, q_len))
        # position_ids gather is data-dependent -> plain JAX; rotation + the
        # (B,S,H,D)->(B,H,S,D) relayout run fused in one Pallas kernel.
        cos_g = cos[0, 0][position_ids]       # (bsz, q_len, head_dim)
        sin_g = sin[0, 0][position_ids]
        q, k, v = _rope_and_relayout_pallas(q, k, v, cos_g, sin_g)

        if past_key_value is not None:
            k = jnp.concatenate([past_key_value[0], k], axis=2)
            v = jnp.concatenate([past_key_value[1], v], axis=2)
        present = (k, v) if use_cache else None

        has_mask = attention_mask is not None
        mask = attention_mask.astype(jnp.float32) if has_mask else None

        attn_out = _flash_attention_pallas(
            q, k, v, mask, n_rep=self.num_key_value_groups,
            scale=1.0 / math.sqrt(self.head_dim), has_mask=has_mask)
        attn_out = attn_out.transpose(0, 2, 1, 3).reshape(
            bsz * q_len, self.hidden_size)
        out = _linear_pallas(attn_out, self.o_w).reshape(
            bsz, q_len, self.hidden_size)
        # TODO(synk): output_attentions=True would require the flash kernel to
        # also emit the softmax weights; None is returned instead.
        return out, None, present


# --------------------------------------------------------------------------
# Pure-JAX references for validation
# --------------------------------------------------------------------------
def _reference_cos_sin(dim, seq_len, base, dtype):
    inv_freq = 1.0 / (jnp.asarray(base, jnp.float32)
                      ** (jnp.arange(0, dim, 2, dtype=jnp.float32) / dim))
    t = jnp.arange(seq_len, dtype=jnp.float32)
    freqs = jnp.einsum("i,j->ij", t, inv_freq)
    emb = jnp.concatenate([freqs, freqs], axis=-1)
    return (jnp.cos(emb)[None, None, :, :].astype(dtype),
            jnp.sin(emb)[None, None, :, :].astype(dtype))


def _reference_attention(attn, hidden_states, attention_mask, position_ids):
    hp = jax.lax.Precision.HIGHEST
    b, s, _ = hidden_states.shape
    q = jnp.einsum("bsh,hd->bsd", hidden_states, attn.q_w, precision=hp)
    k = jnp.einsum("bsh,hd->bsd", hidden_states, attn.k_w, precision=hp)
    v = jnp.einsum("bsh,hd->bsd", hidden_states, attn.v_w, precision=hp)
    q = q.reshape(b, s, attn.num_heads, attn.head_dim).transpose(0, 2, 1, 3)
    k = k.reshape(b, s, attn.num_key_value_heads, attn.head_dim).transpose(0, 2, 1, 3)
    v = v.reshape(b, s, attn.num_key_value_heads, attn.head_dim).transpose(0, 2, 1, 3)
    cos, sin = _reference_cos_sin(attn.head_dim, s, attn.rotary_emb.base,
                                  jnp.float32)
    cos = cos[0, 0][position_ids][:, None, :, :]
    sin = sin[0, 0][position_ids][:, None, :, :]

    def rot(x):
        h = x.shape[-1] // 2
        return jnp.concatenate([-x[..., h:], x[..., :h]], axis=-1)

    q = q * cos + rot(q) * sin
    k = k * cos + rot(k) * sin
    k = jnp.repeat(k, attn.num_key_value_groups, axis=1)
    v = jnp.repeat(v, attn.num_key_value_groups, axis=1)
    scores = jnp.einsum("bhqd,bhkd->bhqk", q, k, precision=hp)
    scores = scores / math.sqrt(attn.head_dim) + attention_mask
    probs = jax.nn.softmax(scores.astype(jnp.float32), axis=-1)
    out = jnp.einsum("bhqk,bhkd->bhqd", probs, v, precision=hp)
    out = out.transpose(0, 2, 1, 3).reshape(b, s, attn.hidden_size)
    return jnp.einsum("bsh,hd->bsd", out, attn.o_w, precision=hp)


if __name__ == "__main__":
    batch, seq, hidden = 2, 8, 32
    num_heads, num_kv_heads, max_pos = 4, 2, 64
    cfg = LlamaConfig(hidden_size=hidden, num_attention_heads=num_heads,
                      num_key_value_heads=num_kv_heads,
                      max_position_embeddings=max_pos)

    root = jax.random.PRNGKey(0)
    k_params, k_x = jax.random.split(root)
    attn = LlamaAttention(cfg, k_params)

    x = jax.random.normal(k_x, (batch, seq, hidden), dtype=jnp.float32)
    position_ids = jnp.broadcast_to(
        jnp.arange(seq, dtype=jnp.int32)[None, :], (batch, seq))
    causal = jnp.tril(jnp.ones((seq, seq), dtype=bool))
    attention_mask = jnp.broadcast_to(
        jnp.where(causal, 0.0, -1e9).astype(jnp.float32)[None, None, :, :],
        (batch, 1, seq, seq))

    out, attn_w, present = attn(x, attention_mask=attention_mask,
                                position_ids=position_ids, use_cache=True)
    out = jax.block_until_ready(out)

    # ---- validate against pure-JAX references ----
    cos, sin = attn.rotary_emb(x, seq_len=seq)
    cos_ref, sin_ref = _reference_cos_sin(attn.head_dim, seq, 10000.0, x.dtype)
    assert cos.shape == (1, 1, seq, attn.head_dim), cos.shape
    assert jnp.allclose(cos, cos_ref, atol=1e-4, rtol=1e-4)
    assert jnp.allclose(sin, sin_ref, atol=1e-4, rtol=1e-4)

    ref = _reference_attention(attn, x, attention_mask, position_ids)
    assert out.shape == (batch, seq, hidden), out.shape
    assert attn_w is None
    assert present[0].shape == (batch, num_kv_heads, seq, attn.head_dim)
    # Tolerance accounts for the approximate (EUP) reciprocal used in the
    # flash-softmax epilogue.
    assert jnp.allclose(out, ref, atol=5e-3, rtol=5e-3), (
        float(jnp.max(jnp.abs(out - ref))))

    # ---- also exercise the mask-less (no zero-mask DMA) path ----
    out_nm, _, _ = attn(x, attention_mask=None, position_ids=position_ids,
                        use_cache=False)
    out_nm = jax.block_until_ready(out_nm)
    ref_nm = _reference_attention(
        attn, x, jnp.zeros((batch, 1, seq, seq), jnp.float32), position_ids)
    assert jnp.allclose(out_nm, ref_nm, atol=5e-3, rtol=5e-3), (
        float(jnp.max(jnp.abs(out_nm - ref_nm))))

    print("KERNEL_OK")
</pallas_src>

<mosaic_0001>
module attributes {stable_mosaic.version = 11 : i64} {
  func.func @_rope_cache_kernel(%arg0: i32, %arg1: memref<1x4xf32, #tpu.memory_space<vmem>>, %arg2: memref<64x16xf32, #tpu.memory_space<vmem>>) attributes {dimension_semantics = [#tpu.dimension_semantics<arbitrary>], iteration_bounds = array<i64: 1>, scalar_prefetch = 0 : i64, scratch_operands = 0 : i64, tpu.core_type = #tpu.core_type<tc>, window_params = [{pipeline_mode = #tpu.pipeline_mode<synchronous>, transform_indices = @transform_0, window_bounds = array<i64: 1, 4>}, {transform_indices = @transform_1, window_bounds = array<i64: 64, 16>}]} {
    %c64_i32 = arith.constant 64 : i32
    %0 = arith.muli %arg0, %c64_i32 : i32
    %1 = arith.sitofp %0 : i32 to f32
    %2 = tpu.iota {dimensions = array<i32: 0>} : vector<64x4xi32>
    %3 = arith.sitofp %2 : vector<64x4xi32> to vector<64x4xf32>
    %4 = vector.broadcast %1 : f32 to vector<64x4xf32>
    %5 = arith.addf %3, %4 : vector<64x4xf32>
    %c0 = arith.constant 0 : index
    %c0_0 = arith.constant 0 : index
    %6 = vector.load %arg1[%c0, %c0_0] : memref<1x4xf32, #tpu.memory_space<vmem>>, vector<1x4xf32>
    %7 = vector.broadcast %6 : vector<1x4xf32> to vector<64x4xf32>
    %8 = arith.mulf %5, %7 : vector<64x4xf32>
    %9 = math.cos %8 : vector<64x4xf32>
    %10 = math.sin %8 : vector<64x4xf32>
    %11 = tpu.concatenate %9, %9, %10, %10 in 1 : vector<64x4xf32>, vector<64x4xf32>, vector<64x4xf32>, vector<64x4xf32> -> vector<64x16xf32>
    %c0_1 = arith.constant 0 : index
    %c0_2 = arith.constant 0 : index
    %12 = vector.load %arg2[%c0_1, %c0_2] : memref<64x16xf32, #tpu.memory_space<vmem>>, vector<64x16xf32>
    tpu.vector_store %arg2[%c0_1, %c0_2], %11 {strides = array<i32>} : memref<64x16xf32, #tpu.memory_space<vmem>>, vector<64x16xf32>,
    return
  }
  func.func @transform_0(%arg0: i32) -> (i32, i32) {
    %c0_i32 = arith.constant 0 : i32
    %c0_i32_0 = arith.constant 0 : i32
    %c0_i32_1 = arith.constant 0 : i32
    return %c0_i32, %c0_i32_0 : i32, i32
  }
  func.func @transform_1(%arg0: i32) -> (i32, i32) {
    %c0_i32 = arith.constant 0 : i32
    %c0_i32_0 = arith.constant 0 : i32
    return %arg0, %c0_i32 : i32, i32
  }
}

</mosaic_0001>

<llo_original>
// kernel: _rope_cache_pallas.1
$region0: #{_rope_cache_pallas.1}
  #allocation0 [shape = 'u32[]', space=smem, size = 0x4, offset = 0x4, fixed_abs, tag = 'smem constant byte address 0x4 - core index']
  #allocation1 [shape = 'u32[144,128]{1,0:T(1,128)}', space=vmem, size = 0x12000, scoped, tag = 'internal scratch']
  %s0 = inlined_call_operand.hbm [shape: f32[1,4], index: 0, kind: input, shape index: {}]
  %s1 = inlined_call_operand.vmem [shape: f32[64,16], index: 1, kind: output, shape index: {}]
  %s2 = sld [smem:[#allocation0]]
  $region18: #{_rope_cache_pallas.1} parent=0
    _
  %s4 = ssub.s32 1, %s2
  %s5 = scalar_select 0, %s4, %s2
  $region1: #{_rope_cache_pallas.1} parent=0
    #allocation2 [shape = 'u8[512]{0}', space=vmem, size = 0x400, scoped, tag = 'input window, operand 0, single buffered']
    #allocation3 [shape = 's32[1]{0}', space=sflag, size = 0x4, scoped, tag = 'scoped memory for _rope_cache_pallas.1']
    %6 = vsyncpa [#allocation3], 0
    // Predicated region
    $region2: #{_rope_cache_pallas.1} parent=1 // pred_check
      _
    $region3: #{_rope_cache_pallas.1} parent=1 // pred_check_branch
      %8 = sbr.rel (0) target = $region5
    $region4: #{_rope_cache_pallas.1} parent=1 // pred_region
      %s10 = ssub.s32 16, 16
      %11 = vsyncadd [#allocation3], %s10
      %s13 = sshll.u32 [#allocation2], 4
      %s14 = int_to_ptr.vmem [resolvable:$true] %s13
      %16 = dma.hbm_to_vmem [thread:$0]  %s0, 16, %s14, [#allocation3]
    $region5: #{_rope_cache_pallas.1} parent=1 // pred_fallthru
      _
    // Predicated region
    $region6: #{_rope_cache_pallas.1} parent=1 // pred_check
      _
    $region7: #{_rope_cache_pallas.1} parent=1 // pred_check_branch
      %18 = sbr.rel (0) target = $region9
    $region8: #{_rope_cache_pallas.1} parent=1 // pred_region
      %19 = dma.done [#allocation3], 16
    $region9: #{_rope_cache_pallas.1} parent=1 // pred_fallthru
      _
    %s20 = smul.u32 0, 64
    %s21 = scvt.s32.f32 %s20
    %v22 = vlaneseq
    %v23 = vshrl.u32 %v22, 7
    %v24 = vadd.s32 %v23, 8
    %v25 = vadd.s32 %v23, 16
    %v26 = vadd.s32 %v23, 24
    %v27 = vadd.s32 %v23, 32
    %v28 = vadd.s32 %v23, 40
    %v29 = vadd.s32 %v23, 48
    %v30 = vadd.s32 %v23, 56
    %v31 = vcvt.s32.f32 %v23
    %v32 = vcvt.s32.f32 %v24
    %v33 = vcvt.s32.f32 %v25
    %v34 = vcvt.s32.f32 %v26
    %v35 = vcvt.s32.f32 %v27
    %v36 = vcvt.s32.f32 %v28
    %v37 = vcvt.s32.f32 %v29
    %v38 = vcvt.s32.f32 %v30
    %v39 = vstv %s21
    %v40 = vadd.f32 %v31, %v39
    %v41 = vadd.f32 %v32, %v39
    %v42 = vadd.f32 %v33, %v39
    %v43 = vadd.f32 %v34, %v39
    %v44 = vadd.f32 %v35, %v39
    %v45 = vadd.f32 %v36, %v39
    %v46 = vadd.f32 %v37, %v39
    %v47 = vadd.f32 %v38, %v39
    %v48 = vld [vmem:[#allocation2] sm:$0x1]
    %v50 = vlaneseq
    %v51 = vshrl.u32 %v50, 7
    %v52 = vsub.s32 0, %v51
    %v53 = vrot.slane %v48, %v52
    %v55 = vmul.f32 %v40, %v53
    %v56 = vmul.f32 %v41, %v53
    %v57 = vmul.f32 %v42, %v53
    %v58 = vmul.f32 %v43, %v53
    %v59 = vmul.f32 %v44, %v53
    %v60 = vmul.f32 %v45, %v53
    %v61 = vmul.f32 %v46, %v53
    %v62 = vmul.f32 %v47, %v53
    %v63 = vand.u32 2147483647, %v55
    %vm64 = vcmp.le.f32.partialorder %v63, 0.7853982
    %vm65 = vcmp.lt.s32.totalorder %v55, 0
    %v66 = vand.u32 %v55, 2139095040
    %v67 = vshrl.u32 %v66, 23
    %v68 = vsub.s32 %v67, 127
    %v69 = vand.u32 2147483647, %v55
    %v70 = vand.u32 %v69, 8388607
    %v71 = vor.u32 %v70, 8388608
    %v72 = vsub.s32 0, %v71
    %v73 = vadd.s32 %v68, 1
    %vm74 = vcmp.gt.s32.totalorder %v73, 0
    %v75 = vsel %vm74, %v73, 0
    %v76 = vshrl.u32 %v75, 5
    %v77 = vand.u32 %v75, 31
    %v78 = vsub.s32 32, %v77
    %v79 = vshrl.u32 683565275, %v78
    %v80 = vshll.u32 683565275, %v77
    %v81 = vshrl.u32 2475754826, %v78
    %v82 = vor.u32 %v80, %v81
    %v83 = vshll.u32 2475754826, %v77
    %v84 = vshrl.u32 2131351028, %v78
    %v85 = vor.u32 %v83, %v84
    %v86 = vshll.u32 2131351028, %v77
    %v87 = vshrl.u32 2102212464, %v78
    %v88 = vor.u32 %v86, %v87
    %v89 = vshll.u32 2102212464, %v77
    %v90 = vshrl.u32 920167782, %v78
    %v91 = vor.u32 %v89, %v90
    %v92 = vshll.u32 920167782, %v77
    %v93 = vshrl.u32 1326507024, %v78
    %v94 = vor.u32 %v92, %v93
    %vm95 = vcmp.lt.s32.totalorder %v76, 1
    %vm96 = vcmp.lt.s32.totalorder %v76, 2
    %vm97 = vcmp.lt.s32.totalorder %v76, 3
    %vm98 = vcmp.lt.s32.totalorder %v76, 4
    %v99 = vsel %vm95, %v79, %v82
    %v100 = vsel %vm98, %v88, 2102212464
    %v101 = vsel %vm97, %v85, %v100
    %v102 = vsel %vm96, %v99, %v101
    %v103 = vsel %vm95, %v82, %v85
    %v104 = vsel %vm98, %v91, 920167782
    %v105 = vsel %vm97, %v88, %v104
    %v106 = vsel %vm96, %v103, %v105
    %v107 = vsel %vm95, %v85, %v88
    %v108 = vsel %vm98, %v94, 1326507024
    %v109 = vsel %vm97, %v91, %v108
    %v110 = vsel %vm96, %v107, %v109
    %v111 = vshll.u32 %v71, 8
    %v112 = vmul.u32.u64.compose %v111, %v110
    %v113 = vextract.low.u32 %v112
    %v114 = vextract.high.u32 %v112
    %v115 = vmul.u32.u64.compose %v111, %v106
    %v116 = vextract.low.u32 %v115
    %v117 = vextract.high.u32 %v115
    %v118 = vmul.u32 %v111, %v102
    %v119 = vadd.s32 %v114, %v116
    %vm120 = vc.u32 %v114, %v116
    %v121 = vadd.s32 %v117, 1
    %v122 = vsel %vm120, %v121, %v117
    %v123 = vadd.s32 %v118, %v122
    %v124 = vadd.s32 %v123, 536870912
    %v125 = vshrl.u32 %v124, 30
    %v126 = vshll.u32 %v125, 30
    %v127 = vsub.s32 %v123, %v126
    %vm128 = vcmp.lt.s32.totalorder %v127, 0
    %v129 = vsub.s32 0, %v127
    %v130 = vsel %vm128, %v129, %v127
    %v131 = vclz %v130
    %v132 = vsub.s32 %v131, 2
    %vm133 = vcmp.gt.s32.totalorder 0, %v132
    %v134 = vsel %vm133, 0, %v132
    %v135 = vsub.s32 32, %v134
    %v136 = vshll.u32 %v127, %v134
    %v137 = vshrl.u32 %v119, %v135
    %v138 = vor.u32 %v136, %v137
    %v139 = vsub.s32 4294967266, %v134
    %v140 = vadd.s32 %v139, 127
    %v141 = vshll.u32 %v140, 23
    %v142 = vor.u32 4788187, %v141
    %v143 = vand.u32 2147483647, %v142
    %v145 = vcvt.s32.f32 %v138
    %v146 = vmul.f32 %v145, %v143
    %v147 = vxor.u32 %v146, 2147483648
    %v148 = vsel %vm65, %v147, %v146
    %v149 = vsub.s32 4, %v125
    %v150 = vsel %vm65, %v149, %v125
    %v151 = vsel %vm64, %v55, %v148
    %v152 = vsel %vm64, 0, %v150
    %v153 = vcosq.f32.pop %v151
    %v154 = vsinq.f32.pop %v151
    %vm155 = vweird.f32 %v55
    %v156 = vand.u32 %v152, 3
    %vm157 = vcmp.lt.s32.totalorder %v156, 2
    %vm158 = vcmp.eq.s32.totalorder %v156, 0
    %v159 = vxor.u32 %v154, 2147483648
    %v160 = vsel %vm158, %v153, %v159
    %vm161 = vcmp.eq.s32.totalorder %v156, 2
    %v162 = vxor.u32 %v153, 2147483648
    %v163 = vsel %vm161, %v162, %v154
    %v164 = vsel %vm157, %v160, %v163
    %v165 = vsel %vm155, nan, %v164
    %v166 = vand.u32 2147483647, %v56
    %vm167 = vcmp.le.f32.partialorder %v166, 0.7853982
    %vm168 = vcmp.lt.s32.totalorder %v56, 0
    %v169 = vand.u32 %v56, 2139095040
    %v170 = vshrl.u32 %v169, 23
    %v171 = vsub.s32 %v170, 127
    %v172 = vand.u32 2147483647, %v56
    %v173 = vand.u32 %v172, 8388607
    %v174 = vor.u32 %v173, 8388608
    %v175 = vsub.s32 0, %v174
    %v176 = vadd.s32 %v171, 1
    %vm177 = vcmp.gt.s32.totalorder %v176, 0
    %v178 = vsel %vm177, %v176, 0
    %v179 = vshrl.u32 %v178, 5
    %v180 = vand.u32 %v178, 31
    %v181 = vsub.s32 32, %v180
    %v182 = vshrl.u32 683565275, %v181
    %v183 = vshll.u32 683565275, %v180
    %v184 = vshrl.u32 2475754826, %v181
    %v185 = vor.u32 %v183, %v184
    %v186 = vshll.u32 2475754826, %v180
    %v187 = vshrl.u32 2131351028, %v181
    %v188 = vor.u32 %v186, %v187
    %v189 = vshll.u32 2131351028, %v180
    %v190 = vshrl.u32 2102212464, %v181
    %v191 = vor.u32 %v189, %v190
    %v192 = vshll.u32 2102212464, %v180
    %v193 = vshrl.u32 920167782, %v181
    %v194 = vor.u32 %v192, %v193
    %v195 = vshll.u32 920167782, %v180
    %v196 = vshrl.u32 1326507024, %v181
    %v197 = vor.u32 %v195, %v196
    %vm198 = vcmp.lt.s32.totalorder %v179, 1
    %vm199 = vcmp.lt.s32.totalorder %v179, 2
    %vm200 = vcmp.lt.s32.totalorder %v179, 3
    %vm201 = vcmp.lt.s32.totalorder %v179, 4
    %v202 = vsel %vm198, %v182, %v185
    %v203 = vsel %vm201, %v191, 2102212464
    %v204 = vsel %vm200, %v188, %v203
    %v205 = vsel %vm199, %v202, %v204
    %v206 = vsel %vm198, %v185, %v188
    %v207 = vsel %vm201, %v194, 920167782
    %v208 = vsel %vm200, %v191, %v207
    %v209 = vsel %vm199, %v206, %v208
    %v210 = vsel %vm198, %v188, %v191
    %v211 = vsel %vm201, %v197, 1326507024
    %v212 = vsel %vm200, %v194, %v211
    %v213 = vsel %vm199, %v210, %v212
    %v214 = vshll.u32 %v174, 8
    %v215 = vmul.u32.u64.compose %v214, %v213
    %v216 = vextract.low.u32 %v215
    %v217 = vextract.high.u32 %v215
    %v218 = vmul.u32.u64.compose %v214, %v209
    %v219 = vextract.low.u32 %v218
    %v220 = vextract.high.u32 %v218
    %v221 = vmul.u32 %v214, %v205
    %v222 = vadd.s32 %v217, %v219
    %vm223 = vc.u32 %v217, %v219
    %v224 = vadd.s32 %v220, 1
    %v225 = vsel %vm223, %v224, %v220
    %v226 = vadd.s32 %v221, %v225
    %v227 = vadd.s32 %v226, 536870912
    %v228 = vshrl.u32 %v227, 30
    %v229 = vshll.u32 %v228, 30
    %v230 = vsub.s32 %v226, %v229
    %vm231 = vcmp.lt.s32.totalorder %v230, 0
    %v232 = vsub.s32 0, %v230
    %v233 = vsel %vm231, %v232, %v230
    %v234 = vclz %v233
    %v235 = vsub.s32 %v234, 2
    %vm236 = vcmp.gt.s32.totalorder 0, %v235
    %v237 = vsel %vm236, 0, %v235
    %v238 = vsub.s32 32, %v237
    %v239 = vshll.u32 %v230, %v237
    %v240 = vshrl.u32 %v222, %v238
    %v241 = vor.u32 %v239, %v240
    %v242 = vsub.s32 4294967266, %v237
    %v243 = vadd.s32 %v242, 127
    %v244 = vshll.u32 %v243, 23
    %v245 = vor.u32 4788187, %v244
    %v246 = vand.u32 2147483647, %v245
    %v248 = vcvt.s32.f32 %v241
    %v249 = vmul.f32 %v248, %v246
    %v250 = vxor.u32 %v249, 2147483648
    %v251 = vsel %vm168, %v250, %v249
    %v252 = vsub.s32 4, %v228
    %v253 = vsel %vm168, %v252, %v228
    %v254 = vsel %vm167, %v56, %v251
    %v255 = vsel %vm167, 0, %v253
    %v256 = vcosq.f32.pop %v254
    %v257 = vsinq.f32.pop %v254
    %vm258 = vweird.f32 %v56
    %v259 = vand.u32 %v255, 3
    %vm260 = vcmp.lt.s32.totalorder %v259, 2
    %vm261 = vcmp.eq.s32.totalorder %v259, 0
    %v262 = vxor.u32 %v257, 2147483648
    %v263 = vsel %vm261, %v256, %v262
    %vm264 = vcmp.eq.s32.totalorder %v259, 2
    %v265 = vxor.u32 %v256, 2147483648
    %v266 = vsel %vm264, %v265, %v257
    %v267 = vsel %vm260, %v263, %v266
    %v268 = vsel %vm258, nan, %v267
    %v269 = vand.u32 2147483647, %v57
    %vm270 = vcmp.le.f32.partialorder %v269, 0.7853982
    %vm271 = vcmp.lt.s32.totalorder %v57, 0
    %v272 = vand.u32 %v57, 2139095040
    %v273 = vshrl.u32 %v272, 23
    %v274 = vsub.s32 %v273, 127
    %v275 = vand.u32 2147483647, %v57
    %v276 = vand.u32 %v275, 8388607
    %v277 = vor.u32 %v276, 8388608
    %v278 = vsub.s32 0, %v277
    %v279 = vadd.s32 %v274, 1
    %vm280 = vcmp.gt.s32.totalorder %v279, 0
    %v281 = vsel %vm280, %v279, 0
    %v282 = vshrl.u32 %v281, 5
    %v283 = vand.u32 %v281, 31
    %v284 = vsub.s32 32, %v283
    %v285 = vshrl.u32 683565275, %v284
    %v286 = vshll.u32 683565275, %v283
    %v287 = vshrl.u32 2475754826, %v284
    %v288 = vor.u32 %v286, %v287
    %v289 = vshll.u32 2475754826, %v283
    %v290 = vshrl.u32 2131351028, %v284
    %v291 = vor.u32 %v289, %v290
    %v292 = vshll.u32 2131351028, %v283
    %v293 = vshrl.u32 2102212464, %v284
    %v294 = vor.u32 %v292, %v293
    %v295 = vshll.u32 2102212464, %v283
    %v296 = vshrl.u32 920167782, %v284
    %v297 = vor.u32 %v295, %v296
    %v298 = vshll.u32 920167782, %v283
    %v299 = vshrl.u32 1326507024, %v284
    %v300 = vor.u32 %v298, %v299
    %vm301 = vcmp.lt.s32.totalorder %v282, 1
    %vm302 = vcmp.lt.s32.totalorder %v282, 2
    %vm303 = vcmp.lt.s32.totalorder %v282, 3
    %vm304 = vcmp.lt.s32.totalorder %v282, 4
    %v305 = vsel %vm301, %v285, %v288
    %v306 = vsel %vm304, %v294, 2102212464
    %v307 = vsel %vm303, %v291, %v306
    %v308 = vsel %vm302, %v305, %v307
    %v309 = vsel %vm301, %v288, %v291
    %v310 = vsel %vm304, %v297, 920167782
    %v311 = vsel %vm303, %v294, %v310
    %v312 = vsel %vm302, %v309, %v311
    %v313 = vsel %vm301, %v291, %v294
    %v314 = vsel %vm304, %v300, 1326507024
    %v315 = vsel %vm303, %v297, %v314
    %v316 = vsel %vm302, %v313, %v315
    %v317 = vshll.u32 %v277, 8
    %v318 = vmul.u32.u64.compose %v317, %v316
    %v319 = vextract.low.u32 %v318
    %v320 = vextract.high.u32 %v318
    %v321 = vmul.u32.u64.compose %v317, %v312
    %v322 = vextract.low.u32 %v321
    %v323 = vextract.high.u32 %v321
    %v324 = vmul.u32 %v317, %v308
    %v325 = vadd.s32 %v320, %v322
    %vm326 = vc.u32 %v320, %v322
    %v327 = vadd.s32 %v323, 1
    %v328 = vsel %vm326, %v327, %v323
    %v329 = vadd.s32 %v324, %v328
    %v330 = vadd.s32 %v329, 536870912
    %v331 = vshrl.u32 %v330, 30
    %v332 = vshll.u32 %v331, 30
    %v333 = vsub.s32 %v329, %v332
    %vm334 = vcmp.lt.s32.totalorder %v333, 0
    %v335 = vsub.s32 0, %v333
    %v336 = vsel %vm334, %v335, %v333
    %v337 = vclz %v336
    %v338 = vsub.s32 %v337, 2
    %vm339 = vcmp.gt.s32.totalorder 0, %v338
    %v340 = vsel %vm339, 0, %v338
    %v341 = vsub.s32 32, %v340
    %v342 = vshll.u32 %v333, %v340
    %v343 = vshrl.u32 %v325, %v341
    %v344 = vor.u32 %v342, %v343
    %v345 = vsub.s32 4294967266, %v340
    %v346 = vadd.s32 %v345, 127
    %v347 = vshll.u32 %v346, 23
    %v348 = vor.u32 4788187, %v347
    %v349 = vand.u32 2147483647, %v348
    %v351 = vcvt.s32.f32 %v344
    %v352 = vmul.f32 %v351, %v349
    %v353 = vxor.u32 %v352, 2147483648
    %v354 = vsel %vm271, %v353, %v352
    %v355 = vsub.s32 4, %v331
    %v356 = vsel %vm271, %v355, %v331
    %v357 = vsel %vm270, %v57, %v354
    %v358 = vsel %vm270, 0, %v356
    %v359 = vcosq.f32.pop %v357
    %v360 = vsinq.f32.pop %v357
    %vm361 = vweird.f32 %v57
    %v362 = vand.u32 %v358, 3
    %vm363 = vcmp.lt.s32.totalorder %v362, 2
    %vm364 = vcmp.eq.s32.totalorder %v362, 0
    %v365 = vxor.u32 %v360, 2147483648
    %v366 = vsel %vm364, %v359, %v365
    %vm367 = vcmp.eq.s32.totalorder %v362, 2
    %v368 = vxor.u32 %v359, 2147483648
    %v369 = vsel %vm367, %v368, %v360
    %v370 = vsel %vm363, %v366, %v369
    %v371 = vsel %vm361, nan, %v370
    %v372 = vand.u32 2147483647, %v58
    %vm373 = vcmp.le.f32.partialorder %v372, 0.7853982
    %vm374 = vcmp.lt.s32.totalorder %v58, 0
    %v375 = vand.u32 %v58, 2139095040
    %v376 = vshrl.u32 %v375, 23
    %v377 = vsub.s32 %v376, 127
    %v378 = vand.u32 2147483647, %v58
    %v379 = vand.u32 %v378, 8388607
    %v380 = vor.u32 %v379, 8388608
    %v381 = vsub.s32 0, %v380
    %v382 = vadd.s32 %v377, 1
    %vm383 = vcmp.gt.s32.totalorder %v382, 0
    %v384 = vsel %vm383, %v382, 0
    %v385 = vshrl.u32 %v384, 5
    %v386 = vand.u32 %v384, 31
    %v387 = vsub.s32 32, %v386
    %v388 = vshrl.u32 683565275, %v387
    %v389 = vshll.u32 683565275, %v386
    %v390 = vshrl.u32 2475754826, %v387
    %v391 = vor.u32 %v389, %v390
    %v392 = vshll.u32 2475754826, %v386
    %v393 = vshrl.u32 2131351028, %v387
    %v394 = vor.u32 %v392, %v393
    %v395 = vshll.u32 2131351028, %v386
    %v396 = vshrl.u32 2102212464, %v387
    %v397 = vor.u32 %v395, %v396
    %v398 = vshll.u32 2102212464, %v386
    %v399 = vshrl.u32 920167782, %v387
    %v400 = vor.u32 %v398, %v399
    %v401 = vshll.u32 920167782, %v386
    %v402 = vshrl.u32 1326507024, %v387
    %v403 = vor.u32 %v401, %v402
    %vm404 = vcmp.lt.s32.totalorder %v385, 1
    %vm405 = vcmp.lt.s32.totalorder %v385, 2
    %vm406 = vcmp.lt.s32.totalorder %v385, 3
    %vm407 = vcmp.lt.s32.totalorder %v385, 4
    %v408 = vsel %vm404, %v388, %v391
    %v409 = vsel %vm407, %v397, 2102212464
    %v410 = vsel %vm406, %v394, %v409
    %v411 = vsel %vm405, %v408, %v410
    %v412 = vsel %vm404, %v391, %v394
    %v413 = vsel %vm407, %v400, 920167782
    %v414 = vsel %vm406, %v397, %v413
    %v415 = vsel %vm405, %v412, %v414
    %v416 = vsel %vm404, %v394, %v397
    %v417 = vsel %vm407, %v403, 1326507024
    %v418 = vsel %vm406, %v400, %v417
    %v419 = vsel %vm405, %v416, %v418
    %v420 = vshll.u32 %v380, 8
    %v421 = vmul.u32.u64.compose %v420, %v419
    %v422 = vextract.low.u32 %v421
    %v423 = vextract.high.u32 %v421
    %v424 = vmul.u32.u64.compose %v420, %v415
    %v425 = vextract.low.u32 %v424
    %v426 = vextract.high.u32 %v424
    %v427 = vmul.u32 %v420, %v411
    %v428 = vadd.s32 %v423, %v425
    %vm429 = vc.u32 %v423, %v425
    %v430 = vadd.s32 %v426, 1
    %v431 = vsel %vm429, %v430, %v426
    %v432 = vadd.s32 %v427, %v431
    %v433 = vadd.s32 %v432, 536870912
    %v434 = vshrl.u32 %v433, 30
    %v435 = vshll.u32 %v434, 30
    %v436 = vsub.s32 %v432, %v435
    %vm437 = vcmp.lt.s32.totalorder %v436, 0
    %v438 = vsub.s32 0, %v436
    %v439 = vsel %vm437, %v438, %v436
    %v440 = vclz %v439
    %v441 = vsub.s32 %v440, 2
    %vm442 = vcmp.gt.s32.totalorder 0, %v441
    %v443 = vsel %vm442, 0, %v441
    %v444 = vsub.s32 32, %v443
    %v445 = vshll.u32 %v436, %v443
    %v446 = vshrl.u32 %v428, %v444
    %v447 = vor.u32 %v445, %v446
    %v448 = vsub.s32 4294967266, %v443
    %v449 = vadd.s32 %v448, 127
    %v450 = vshll.u32 %v449, 23
    %v451 = vor.u32 4788187, %v450
    %v452 = vand.u32 2147483647, %v451
    %v454 = vcvt.s32.f32 %v447
    %v455 = vmul.f32 %v454, %v452
    %v456 = vxor.u32 %v455, 2147483648
    %v457 = vsel %vm374, %v456, %v455
    %v458 = vsub.s32 4, %v434
    %v459 = vsel %vm374, %v458, %v434
    %v460 = vsel %vm373, %v58, %v457
    %v461 = vsel %vm373, 0, %v459
    %v462 = vcosq.f32.pop %v460
    %v463 = vsinq.f32.pop %v460
    %vm464 = vweird.f32 %v58
    %v465 = vand.u32 %v461, 3
    %vm466 = vcmp.lt.s32.totalorder %v465, 2
    %vm467 = vcmp.eq.s32.totalorder %v465, 0
    %v468 = vxor.u32 %v463, 2147483648
    %v469 = vsel %vm467, %v462, %v468
    %vm470 = vcmp.eq.s32.totalorder %v465, 2
    %v471 = vxor.u32 %v462, 2147483648
    %v472 = vsel %vm470, %v471, %v463
    %v473 = vsel %vm466, %v469, %v472
    %v474 = vsel %vm464, nan, %v473
    %v475 = vand.u32 2147483647, %v59
    %vm476 = vcmp.le.f32.partialorder %v475, 0.7853982
    %vm477 = vcmp.lt.s32.totalorder %v59, 0
    %v478 = vand.u32 %v59, 2139095040
    %v479 = vshrl.u32 %v478, 23
    %v480 = vsub.s32 %v479, 127
    %v481 = vand.u32 2147483647, %v59
    %v482 = vand.u32 %v481, 8388607
    %v483 = vor.u32 %v482, 8388608
    %v484 = vsub.s32 0, %v483
    %v485 = vadd.s32 %v480, 1
    %vm486 = vcmp.gt.s32.totalorder %v485, 0
    %v487 = vsel %vm486, %v485, 0
    %v488 = vshrl.u32 %v487, 5
    %v489 = vand.u32 %v487, 31
    %v490 = vsub.s32 32, %v489
    %v491 = vshrl.u32 683565275, %v490
    %v492 = vshll.u32 683565275, %v489
    %v493 = vshrl.u32 2475754826, %v490
    %v494 = vor.u32 %v492, %v493
    %v495 = vshll.u32 2475754826, %v489
    %v496 = vshrl.u32 2131351028, %v490
    %v497 = vor.u32 %v495, %v496
    %v498 = vshll.u32 2131351028, %v489
    %v499 = vshrl.u32 2102212464, %v490
    %v500 = vor.u32 %v498, %v499
    %v501 = vshll.u32 2102212464, %v489
    %v502 = vshrl.u32 920167782, %v490
    %v503 = vor.u32 %v501, %v502
    %v504 = vshll.u32 920167782, %v489
    %v505 = vshrl.u32 1326507024, %v490
    %v506 = vor.u32 %v504, %v505
    %vm507 = vcmp.lt.s32.totalorder %v488, 1
    %vm508 = vcmp.lt.s32.totalorder %v488, 2
    %vm509 = vcmp.lt.s32.totalorder %v488, 3
    %vm510 = vcmp.lt.s32.totalorder %v488, 4
    %v511 = vsel %vm507, %v491, %v494
    %v512 = vsel %vm510, %v500, 2102212464
    %v513 = vsel %vm509, %v497, %v512
    %v514 = vsel %vm508, %v511, %v513
    %v515 = vsel %vm507, %v494, %v497
    %v516 = vsel %vm510, %v503, 920167782
    %v517 = vsel %vm509, %v500, %v516
    %v518 = vsel %vm508, %v515, %v517
    %v519 = vsel %vm507, %v497, %v500
    %v520 = vsel %vm510, %v506, 1326507024
    %v521 = vsel %vm509, %v503, %v520
    %v522 = vsel %vm508, %v519, %v521
    %v523 = vshll.u32 %v483, 8
    %v524 = vmul.u32.u64.compose %v523, %v522
    %v525 = vextract.low.u32 %v524
    %v526 = vextract.high.u32 %v524
    %v527 = vmul.u32.u64.compose %v523, %v518
    %v528 = vextract.low.u32 %v527
    %v529 = vextract.high.u32 %v527
    %v530 = vmul.u32 %v523, %v514
    %v531 = vadd.s32 %v526, %v528
    %vm532 = vc.u32 %v526, %v528
    %v533 = vadd.s32 %v529, 1
    %v534 = vsel %vm532, %v533, %v529
    %v535 = vadd.s32 %v530, %v534
    %v536 = vadd.s32 %v535, 536870912
    %v537 = vshrl.u32 %v536, 30
    %v538 = vshll.u32 %v537, 30
    %v539 = vsub.s32 %v535, %v538
    %vm540 = vcmp.lt.s32.totalorder %v539, 0
    %v541 = vsub.s32 0, %v539
    %v542 = vsel %vm540, %v541, %v539
    %v543 = vclz %v542
    %v544 = vsub.s32 %v543, 2
    %vm545 = vcmp.gt.s32.totalorder 0, %v544
    %v546 = vsel %vm545, 0, %v544
    %v547 = vsub.s32 32, %v546
    %v548 = vshll.u32 %v539, %v546
    %v549 = vshrl.u32 %v531, %v547
    %v550 = vor.u32 %v548, %v549
    %v551 = vsub.s32 4294967266, %v546
    %v552 = vadd.s32 %v551, 127
    %v553 = vshll.u32 %v552, 23
    %v554 = vor.u32 4788187, %v553
    %v555 = vand.u32 2147483647, %v554
    %v557 = vcvt.s32.f32 %v550
    %v558 = vmul.f32 %v557, %v555
    %v559 = vxor.u32 %v558, 2147483648
    %v560 = vsel %vm477, %v559, %v558
    %v561 = vsub.s32 4, %v537
    %v562 = vsel %vm477, %v561, %v537
    %v563 = vsel %vm476, %v59, %v560
    %v564 = vsel %vm476, 0, %v562
    %v565 = vcosq.f32.pop %v563
    %v566 = vsinq.f32.pop %v563
    %vm567 = vweird.f32 %v59
    %v568 = vand.u32 %v564, 3
    %vm569 = vcmp.lt.s32.totalorder %v568, 2
    %vm570 = vcmp.eq.s32.totalorder %v568, 0
    %v571 = vxor.u32 %v566, 2147483648
    %v572 = vsel %vm570, %v565, %v571
    %vm573 = vcmp.eq.s32.totalorder %v568, 2
    %v574 = vxor.u32 %v565, 2147483648
    %v575 = vsel %vm573, %v574, %v566
    %v576 = vsel %vm569, %v572, %v575
    %v577 = vsel %vm567, nan, %v576
    %v578 = vand.u32 2147483647, %v60
    %vm579 = vcmp.le.f32.partialorder %v578, 0.7853982
    %vm580 = vcmp.lt.s32.totalorder %v60, 0
    %v581 = vand.u32 %v60, 2139095040
    %v582 = vshrl.u32 %v581, 23
    %v583 = vsub.s32 %v582, 127
    %v584 = vand.u32 2147483647, %v60
    %v585 = vand.u32 %v584, 8388607
    %v586 = vor.u32 %v585, 8388608
    %v587 = vsub.s32 0, %v586
    %v588 = vadd.s32 %v583, 1
    %vm589 = vcmp.gt.s32.totalorder %v588, 0
    %v590 = vsel %vm589, %v588, 0
    %v591 = vshrl.u32 %v590, 5
    %v592 = vand.u32 %v590, 31
    %v593 = vsub.s32 32, %v592
    %v594 = vshrl.u32 683565275, %v593
    %v595 = vshll.u32 683565275, %v592
    %v596 = vshrl.u32 2475754826, %v593
    %v597 = vor.u32 %v595, %v596
    %v598 = vshll.u32 2475754826, %v592
    %v599 = vshrl.u32 2131351028, %v593
    %v600 = vor.u32 %v598, %v599
    %v601 = vshll.u32 2131351028, %v592
    %v602 = vshrl.u32 2102212464, %v593
    %v603 = vor.u32 %v601, %v602
    %v604 = vshll.u32 2102212464, %v592
    %v605 = vshrl.u32 920167782, %v593
    %v606 = vor.u32 %v604, %v605
    %v607 = vshll.u32 920167782, %v592
    %v608 = vshrl.u32 1326507024, %v593
    %v609 = vor.u32 %v607, %v608
    %vm610 = vcmp.lt.s32.totalorder %v591, 1
    %vm611 = vcmp.lt.s32.totalorder %v591, 2
    %vm612 = vcmp.lt.s32.totalorder %v591, 3
    %vm613 = vcmp.lt.s32.totalorder %v591, 4
    %v614 = vsel %vm610, %v594, %v597
    %v615 = vsel %vm613, %v603, 2102212464
    %v616 = vsel %vm612, %v600, %v615
    %v617 = vsel %vm611, %v614, %v616
    %v618 = vsel %vm610, %v597, %v600
    %v619 = vsel %vm613, %v606, 920167782
    %v620 = vsel %vm612, %v603, %v619
    %v621 = vsel %vm611, %v618, %v620
    %v622 = vsel %vm610, %v600, %v603
    %v623 = vsel %vm613, %v609, 1326507024
    %v624 = vsel %vm612, %v606, %v623
    %v625 = vsel %vm611, %v622, %v624
    %v626 = vshll.u32 %v586, 8
    %v627 = vmul.u32.u64.compose %v626, %v625
    %v628 = vextract.low.u32 %v627
    %v629 = vextract.high.u32 %v627
    %v630 = vmul.u32.u64.compose %v626, %v621
    %v631 = vextract.low.u32 %v630
    %v632 = vextract.high.u32 %v630
    %v633 = vmul.u32 %v626, %v617
    %v634 = vadd.s32 %v629, %v631
    %vm635 = vc.u32 %v629, %v631
    %v636 = vadd.s32 %v632, 1
    %v637 = vsel %vm635, %v636, %v632
    %v638 = vadd.s32 %v633, %v637
    %v639 = vadd.s32 %v638, 536870912
    %v640 = vshrl.u32 %v639, 30
    %v641 = vshll.u32 %v640, 30
    %v642 = vsub.s32 %v638, %v641
    %vm643 = vcmp.lt.s32.totalorder %v642, 0
    %v644 = vsub.s32 0, %v642
    %v645 = vsel %vm643, %v644, %v642
    %v646 = vclz %v645
    %v647 = vsub.s32 %v646, 2
    %vm648 = vcmp.gt.s32.totalorder 0, %v647
    %v649 = vsel %vm648, 0, %v647
    %v650 = vsub.s32 32, %v649
    %v651 = vshll.u32 %v642, %v649
    %v652 = vshrl.u32 %v634, %v650
    %v653 = vor.u32 %v651, %v652
    %v654 = vsub.s32 4294967266, %v649
    %v655 = vadd.s32 %v654, 127
    %v656 = vshll.u32 %v655, 23
    %v657 = vor.u32 4788187, %v656
    %v658 = vand.u32 2147483647, %v657
    %v660 = vcvt.s32.f32 %v653
    %v661 = vmul.f32 %v660, %v658
    %v662 = vxor.u32 %v661, 2147483648
    %v663 = vsel %vm580, %v662, %v661
    %v664 = vsub.s32 4, %v640
    %v665 = vsel %vm580, %v664, %v640
    %v666 = vsel %vm579, %v60, %v663
    %v667 = vsel %vm579, 0, %v665
    %v668 = vcosq.f32.pop %v666
    %v669 = vsinq.f32.pop %v666
    %vm670 = vweird.f32 %v60
    %v671 = vand.u32 %v667, 3
    %vm672 = vcmp.lt.s32.totalorder %v671, 2
    %vm673 = vcmp.eq.s32.totalorder %v671, 0
    %v674 = vxor.u32 %v669, 2147483648
    %v675 = vsel %vm673, %v668, %v674
    %vm676 = vcmp.eq.s32.totalorder %v671, 2
    %v677 = vxor.u32 %v668, 2147483648
    %v678 = vsel %vm676, %v677, %v669
    %v679 = vsel %vm672, %v675, %v678
    %v680 = vsel %vm670, nan, %v679
    %v681 = vand.u32 2147483647, %v61
    %vm682 = vcmp.le.f32.partialorder %v681, 0.7853982
    %vm683 = vcmp.lt.s32.totalorder %v61, 0
    %v684 = vand.u32 %v61, 2139095040
    %v685 = vshrl.u32 %v684, 23
    %v686 = vsub.s32 %v685, 127
    %v687 = vand.u32 2147483647, %v61
    %v688 = vand.u32 %v687, 8388607
    %v689 = vor.u32 %v688, 8388608
    %v690 = vsub.s32 0, %v689
    %v691 = vadd.s32 %v686, 1
    %vm692 = vcmp.gt.s32.totalorder %v691, 0
    %v693 = vsel %vm692, %v691, 0
    %v694 = vshrl.u32 %v693, 5
    %v695 = vand.u32 %v693, 31
    %v696 = vsub.s32 32, %v695
    %v697 = vshrl.u32 683565275, %v696
    %v698 = vshll.u32 683565275, %v695
    %v699 = vshrl.u32 2475754826, %v696
    %v700 = vor.u32 %v698, %v699
    %v701 = vshll.u32 2475754826, %v695
    %v702 = vshrl.u32 2131351028, %v696
    %v703 = vor.u32 %v701, %v702
    %v704 = vshll.u32 2131351028, %v695
    %v705 = vshrl.u32 2102212464, %v696
    %v706 = vor.u32 %v704, %v705
    %v707 = vshll.u32 2102212464, %v695
    %v708 = vshrl.u32 920167782, %v696
    %v709 = vor.u32 %v707, %v708
    %v710 = vshll.u32 920167782, %v695
    %v711 = vshrl.u32 1326507024, %v696
    %v712 = vor.u32 %v710, %v711
    %vm713 = vcmp.lt.s32.totalorder %v694, 1
    %vm714 = vcmp.lt.s32.totalorder %v694, 2
    %vm715 = vcmp.lt.s32.totalorder %v694, 3
    %vm716 = vcmp.lt.s32.totalorder %v694, 4
    %v717 = vsel %vm713, %v697, %v700
    %v718 = vsel %vm716, %v706, 2102212464
    %v719 = vsel %vm715, %v703, %v718
    %v720 = vsel %vm714, %v717, %v719
    %v721 = vsel %vm713, %v700, %v703
    %v722 = vsel %vm716, %v709, 920167782
    %v723 = vsel %vm715, %v706, %v722
    %v724 = vsel %vm714, %v721, %v723
    %v725 = vsel %vm713, %v703, %v706
    %v726 = vsel %vm716, %v712, 1326507024
    %v727 = vsel %vm715, %v709, %v726
    %v728 = vsel %vm714, %v725, %v727
    %v729 = vshll.u32 %v689, 8
    %v730 = vmul.u32.u64.compose %v729, %v728
    %v731 = vextract.low.u32 %v730
    %v732 = vextract.high.u32 %v730
    %v733 = vmul.u32.u64.compose %v729, %v724
    %v734 = vextract.low.u32 %v733
    %v735 = vextract.high.u32 %v733
    %v736 = vmul.u32 %v729, %v720
    %v737 = vadd.s32 %v732, %v734
    %vm738 = vc.u32 %v732, %v734
    %v739 = vadd.s32 %v735, 1
    %v740 = vsel %vm738, %v739, %v735
    %v741 = vadd.s32 %v736, %v740
    %v742 = vadd.s32 %v741, 536870912
    %v743 = vshrl.u32 %v742, 30
    %v744 = vshll.u32 %v743, 30
    %v745 = vsub.s32 %v741, %v744
    %vm746 = vcmp.lt.s32.totalorder %v745, 0
    %v747 = vsub.s32 0, %v745
    %v748 = vsel %vm746, %v747, %v745
    %v749 = vclz %v748
    %v750 = vsub.s32 %v749, 2
    %vm751 = vcmp.gt.s32.totalorder 0, %v750
    %v752 = vsel %vm751, 0, %v750
    %v753 = vsub.s32 32, %v752
    %v754 = vshll.u32 %v745, %v752
    %v755 = vshrl.u32 %v737, %v753
    %v756 = vor.u32 %v754, %v755
    %v757 = vsub.s32 4294967266, %v752
    %v758 = vadd.s32 %v757, 127
    %v759 = vshll.u32 %v758, 23
    %v760 = vor.u32 4788187, %v759
    %v761 = vand.u32 2147483647, %v760
    %v763 = vcvt.s32.f32 %v756
    %v764 = vmul.f32 %v763, %v761
    %v765 = vxor.u32 %v764, 2147483648
    %v766 = vsel %vm683, %v765, %v764
    %v767 = vsub.s32 4, %v743
    %v768 = vsel %vm683, %v767, %v743
    %v769 = vsel %vm682, %v61, %v766
    %v770 = vsel %vm682, 0, %v768
    %v771 = vcosq.f32.pop %v769
    %v772 = vsinq.f32.pop %v769
    %vm773 = vweird.f32 %v61
    %v774 = vand.u32 %v770, 3
    %vm775 = vcmp.lt.s32.totalorder %v774, 2
    %vm776 = vcmp.eq.s32.totalorder %v774, 0
    %v777 = vxor.u32 %v772, 2147483648
    %v778 = vsel %vm776, %v771, %v777
    %vm779 = vcmp.eq.s32.totalorder %v774, 2
    %v780 = vxor.u32 %v771, 2147483648
    %v781 = vsel %vm779, %v780, %v772
    %v782 = vsel %vm775, %v778, %v781
    %v783 = vsel %vm773, nan, %v782
    %v784 = vand.u32 2147483647, %v62
    %vm785 = vcmp.le.f32.partialorder %v784, 0.7853982
    %vm786 = vcmp.lt.s32.totalorder %v62, 0
    %v787 = vand.u32 %v62, 2139095040
    %v788 = vshrl.u32 %v787, 23
    %v789 = vsub.s32 %v788, 127
    %v790 = vand.u32 2147483647, %v62
    %v791 = vand.u32 %v790, 8388607
    %v792 = vor.u32 %v791, 8388608
    %v793 = vsub.s32 0, %v792
    %v794 = vadd.s32 %v789, 1
    %vm795 = vcmp.gt.s32.totalorder %v794, 0
    %v796 = vsel %vm795, %v794, 0
    %v797 = vshrl.u32 %v796, 5
    %v798 = vand.u32 %v796, 31
    %v799 = vsub.s32 32, %v798
    %v800 = vshrl.u32 683565275, %v799
    %v801 = vshll.u32 683565275, %v798
    %v802 = vshrl.u32 2475754826, %v799
    %v803 = vor.u32 %v801, %v802
    %v804 = vshll.u32 2475754826, %v798
    %v805 = vshrl.u32 2131351028, %v799
    %v806 = vor.u32 %v804, %v805
    %v807 = vshll.u32 2131351028, %v798
    %v808 = vshrl.u32 2102212464, %v799
    %v809 = vor.u32 %v807, %v808
    %v810 = vshll.u32 2102212464, %v798
    %v811 = vshrl.u32 920167782, %v799
    %v812 = vor.u32 %v810, %v811
    %v813 = vshll.u32 920167782, %v798
    %v814 = vshrl.u32 1326507024, %v799
    %v815 = vor.u32 %v813, %v814
    %vm816 = vcmp.lt.s32.totalorder %v797, 1
    %vm817 = vcmp.lt.s32.totalorder %v797, 2
    %vm818 = vcmp.lt.s32.totalorder %v797, 3
    %vm819 = vcmp.lt.s32.totalorder %v797, 4
    %v820 = vsel %vm816, %v800, %v803
    %v821 = vsel %vm819, %v809, 2102212464
    %v822 = vsel %vm818, %v806, %v821
    %v823 = vsel %vm817, %v820, %v822
    %v824 = vsel %vm816, %v803, %v806
    %v825 = vsel %vm819, %v812, 920167782
    %v826 = vsel %vm818, %v809, %v825
    %v827 = vsel %vm817, %v824, %v826
    %v828 = vsel %vm816, %v806, %v809
    %v829 = vsel %vm819, %v815, 1326507024
    %v830 = vsel %vm818, %v812, %v829
    %v831 = vsel %vm817, %v828, %v830
    %v832 = vshll.u32 %v792, 8
    %v833 = vmul.u32.u64.compose %v832, %v831
    %v834 = vextract.low.u32 %v833
    %v835 = vextract.high.u32 %v833
    %v836 = vmul.u32.u64.compose %v832, %v827
    %v837 = vextract.low.u32 %v836
    %v838 = vextract.high.u32 %v836
    %v839 = vmul.u32 %v832, %v823
    %v840 = vadd.s32 %v835, %v837
    %vm841 = vc.u32 %v835, %v837
    %v842 = vadd.s32 %v838, 1
    %v843 = vsel %vm841, %v842, %v838
    %v844 = vadd.s32 %v839, %v843
    %v845 = vadd.s32 %v844, 536870912
    %v846 = vshrl.u32 %v845, 30
    %v847 = vshll.u32 %v846, 30
    %v848 = vsub.s32 %v844, %v847
    %vm849 = vcmp.lt.s32.totalorder %v848, 0
    %v850 = vsub.s32 0, %v848
    %v851 = vsel %vm849, %v850, %v848
    %v852 = vclz %v851
    %v853 = vsub.s32 %v852, 2
    %vm854 = vcmp.gt.s32.totalorder 0, %v853
    %v855 = vsel %vm854, 0, %v853
    %v856 = vsub.s32 32, %v855
    %v857 = vshll.u32 %v848, %v855
    %v858 = vshrl.u32 %v840, %v856
    %v859 = vor.u32 %v857, %v858
    %v860 = vsub.s32 4294967266, %v855
    %v861 = vadd.s32 %v860, 127
    %v862 = vshll.u32 %v861, 23
    %v863 = vor.u32 4788187, %v862
    %v864 = vand.u32 2147483647, %v863
    %v866 = vcvt.s32.f32 %v859
    %v867 = vmul.f32 %v866, %v864
    %v868 = vxor.u32 %v867, 2147483648
    %v869 = vsel %vm786, %v868, %v867
    %v870 = vsub.s32 4, %v846
    %v871 = vsel %vm786, %v870, %v846
    %v872 = vsel %vm785, %v62, %v869
    %v873 = vsel %vm785, 0, %v871
    %v874 = vcosq.f32.pop %v872
    %v875 = vsinq.f32.pop %v872
    %vm876 = vweird.f32 %v62
    %v877 = vand.u32 %v873, 3
    %vm878 = vcmp.lt.s32.totalorder %v877, 2
    %vm879 = vcmp.eq.s32.totalorder %v877, 0
    %v880 = vxor.u32 %v875, 2147483648
    %v881 = vsel %vm879, %v874, %v880
    %vm882 = vcmp.eq.s32.totalorder %v877, 2
    %v883 = vxor.u32 %v874, 2147483648
    %v884 = vsel %vm882, %v883, %v875
    %v885 = vsel %vm878, %v881, %v884
    %v886 = vsel %vm876, nan, %v885
    %v887 = vand.u32 2147483647, %v55
    %vm888 = vcmp.le.f32.partialorder %v887, 0.7853982
    %vm889 = vcmp.lt.s32.totalorder %v55, 0
    %v890 = vand.u32 %v55, 2139095040
    %v891 = vshrl.u32 %v890, 23
    %v892 = vsub.s32 %v891, 127
    %v893 = vand.u32 2147483647, %v55
    %v894 = vand.u32 %v893, 8388607
    %v895 = vor.u32 %v894, 8388608
    %v896 = vsub.s32 0, %v895
    %v897 = vadd.s32 %v892, 1
    %vm898 = vcmp.gt.s32.totalorder %v897, 0
    %v899 = vsel %vm898, %v897, 0
    %v900 = vshrl.u32 %v899, 5
    %v901 = vand.u32 %v899, 31
    %v902 = vsub.s32 32, %v901
    %v903 = vshrl.u32 683565275, %v902
    %v904 = vshll.u32 683565275, %v901
    %v905 = vshrl.u32 2475754826, %v902
    %v906 = vor.u32 %v904, %v905
    %v907 = vshll.u32 2475754826, %v901
    %v908 = vshrl.u32 2131351028, %v902
    %v909 = vor.u32 %v907, %v908
    %v910 = vshll.u32 2131351028, %v901
    %v911 = vshrl.u32 2102212464, %v902
    %v912 = vor.u32 %v910, %v911
    %v913 = vshll.u32 2102212464, %v901
    %v914 = vshrl.u32 920167782, %v902
    %v915 = vor.u32 %v913, %v914
    %v916 = vshll.u32 920167782, %v901
    %v917 = vshrl.u32 1326507024, %v902
    %v918 = vor.u32 %v916, %v917
    %vm919 = vcmp.lt.s32.totalorder %v900, 1
    %vm920 = vcmp.lt.s32.totalorder %v900, 2
    %vm921 = vcmp.lt.s32.totalorder %v900, 3
    %vm922 = vcmp.lt.s32.totalorder %v900, 4
    %v923 = vsel %vm919, %v903, %v906
    %v924 = vsel %vm922, %v912, 2102212464
    %v925 = vsel %vm921, %v909, %v924
    %v926 = vsel %vm920, %v923, %v925
    %v927 = vsel %vm919, %v906, %v909
    %v928 = vsel %vm922, %v915, 920167782
    %v929 = vsel %vm921, %v912, %v928
    %v930 = vsel %vm920, %v927, %v929
    %v931 = vsel %vm919, %v909, %v912
    %v932 = vsel %vm922, %v918, 1326507024
    %v933 = vsel %vm921, %v915, %v932
    %v934 = vsel %vm920, %v931, %v933
    %v935 = vshll.u32 %v895, 8
    %v936 = vmul.u32.u64.compose %v935, %v934
    %v937 = vextract.low.u32 %v936
    %v938 = vextract.high.u32 %v936
    %v939 = vmul.u32.u64.compose %v935, %v930
    %v940 = vextract.low.u32 %v939
    %v941 = vextract.high.u32 %v939
    %v942 = vmul.u32 %v935, %v926
    %v943 = vadd.s32 %v938, %v940
    %vm944 = vc.u32 %v938, %v940
    %v945 = vadd.s32 %v941, 1
    %v946 = vsel %vm944, %v945, %v941
    %v947 = vadd.s32 %v942, %v946
    %v948 = vadd.s32 %v947, 536870912
    %v949 = vshrl.u32 %v948, 30
    %v950 = vshll.u32 %v949, 30
    %v951 = vsub.s32 %v947, %v950
    %vm952 = vcmp.lt.s32.totalorder %v951, 0
    %v953 = vsub.s32 0, %v951
    %v954 = vsel %vm952, %v953, %v951
    %v955 = vclz %v954
    %v956 = vsub.s32 %v955, 2
    %vm957 = vcmp.gt.s32.totalorder 0, %v956
    %v958 = vsel %vm957, 0, %v956
    %v959 = vsub.s32 32, %v958
    %v960 = vshll.u32 %v951, %v958
    %v961 = vshrl.u32 %v943, %v959
    %v962 = vor.u32 %v960, %v961
    %v963 = vsub.s32 4294967266, %v958
    %v964 = vadd.s32 %v963, 127
    %v965 = vshll.u32 %v964, 23
    %v966 = vor.u32 4788187, %v965
    %v967 = vand.u32 2147483647, %v966
    %v969 = vcvt.s32.f32 %v962
    %v970 = vmul.f32 %v969, %v967
    %v971 = vxor.u32 %v970, 2147483648
    %v972 = vsel %vm889, %v971, %v970
    %v973 = vsub.s32 4, %v949
    %v974 = vsel %vm889, %v973, %v949
    %v975 = vsel %vm888, %v55, %v972
    %v976 = vsel %vm888, 0, %v974
    %v977 = vcosq.f32.pop %v975
    %v978 = vsinq.f32.pop %v975
    %vm979 = vweird.f32 %v55
    %v980 = vadd.s32 %v976, 3
    %v981 = vand.u32 %v980, 3
    %vm982 = vcmp.lt.s32.totalorder %v981, 2
    %vm983 = vcmp.eq.s32.totalorder %v981, 0
    %v984 = vxor.u32 %v978, 2147483648
    %v985 = vsel %vm983, %v977, %v984
    %vm986 = vcmp.eq.s32.totalorder %v981, 2
    %v987 = vxor.u32 %v977, 2147483648
    %v988 = vsel %vm986, %v987, %v978
    %v989 = vsel %vm982, %v985, %v988
    %v990 = vsel %vm979, nan, %v989
    %v991 = vand.u32 2147483647, %v56
    %vm992 = vcmp.le.f32.partialorder %v991, 0.7853982
    %vm993 = vcmp.lt.s32.totalorder %v56, 0
    %v994 = vand.u32 %v56, 2139095040
    %v995 = vshrl.u32 %v994, 23
    %v996 = vsub.s32 %v995, 127
    %v997 = vand.u32 2147483647, %v56
    %v998 = vand.u32 %v997, 8388607
    %v999 = vor.u32 %v998, 8388608
    %v1000 = vsub.s32 0, %v999
    %v1001 = vadd.s32 %v996, 1
    %vm1002 = vcmp.gt.s32.totalorder %v1001, 0
    %v1003 = vsel %vm1002, %v1001, 0
    %v1004 = vshrl.u32 %v1003, 5
    %v1005 = vand.u32 %v1003, 31
    %v1006 = vsub.s32 32, %v1005
    %v1007 = vshrl.u32 683565275, %v1006
    %v1008 = vshll.u32 683565275, %v1005
    %v1009 = vshrl.u32 2475754826, %v1006
    %v1010 = vor.u32 %v1008, %v1009
    %v1011 = vshll.u32 2475754826, %v1005
    %v1012 = vshrl.u32 2131351028, %v1006
    %v1013 = vor.u32 %v1011, %v1012
    %v1014 = vshll.u32 2131351028, %v1005
    %v1015 = vshrl.u32 2102212464, %v1006
    %v1016 = vor.u32 %v1014, %v1015
    %v1017 = vshll.u32 2102212464, %v1005
    %v1018 = vshrl.u32 920167782, %v1006
    %v1019 = vor.u32 %v1017, %v1018
    %v1020 = vshll.u32 920167782, %v1005
    %v1021 = vshrl.u32 1326507024, %v1006
    %v1022 = vor.u32 %v1020, %v1021
    %vm1023 = vcmp.lt.s32.totalorder %v1004, 1
    %vm1024 = vcmp.lt.s32.totalorder %v1004, 2
    %vm1025 = vcmp.lt.s32.totalorder %v1004, 3
    %vm1026 = vcmp.lt.s32.totalorder %v1004, 4
    %v1027 = vsel %vm1023, %v1007, %v1010
    %v1028 = vsel %vm1026, %v1016, 2102212464
    %v1029 = vsel %vm1025, %v1013, %v1028
    %v1030 = vsel %vm1024, %v1027, %v1029
    %v1031 = vsel %vm1023, %v1010, %v1013
    %v1032 = vsel %vm1026, %v1019, 920167782
    %v1033 = vsel %vm1025, %v1016, %v1032
    %v1034 = vsel %vm1024, %v1031, %v1033
    %v1035 = vsel %vm1023, %v1013, %v1016
    %v1036 = vsel %vm1026, %v1022, 1326507024
    %v1037 = vsel %vm1025, %v1019, %v1036
    %v1038 = vsel %vm1024, %v1035, %v1037
    %v1039 = vshll.u32 %v999, 8
    %v1040 = vmul.u32.u64.compose %v1039, %v1038
    %v1041 = vextract.low.u32 %v1040
    %v1042 = vextract.high.u32 %v1040
    %v1043 = vmul.u32.u64.compose %v1039, %v1034
    %v1044 = vextract.low.u32 %v1043
    %v1045 = vextract.high.u32 %v1043
    %v1046 = vmul.u32 %v1039, %v1030
    %v1047 = vadd.s32 %v1042, %v1044
    %vm1048 = vc.u32 %v1042, %v1044
    %v1049 = vadd.s32 %v1045, 1
    %v1050 = vsel %vm1048, %v1049, %v1045
    %v1051 = vadd.s32 %v1046, %v1050
    %v1052 = vadd.s32 %v1051, 536870912
    %v1053 = vshrl.u32 %v1052, 30
    %v1054 = vshll.u32 %v1053, 30
    %v1055 = vsub.s32 %v1051, %v1054
    %vm1056 = vcmp.lt.s32.totalorder %v1055, 0
    %v1057 = vsub.s32 0, %v1055
    %v1058 = vsel %vm1056, %v1057, %v1055
    %v1059 = vclz %v1058
    %v1060 = vsub.s32 %v1059, 2
    %vm1061 = vcmp.gt.s32.totalorder 0, %v1060
    %v1062 = vsel %vm1061, 0, %v1060
    %v1063 = vsub.s32 32, %v1062
    %v1064 = vshll.u32 %v1055, %v1062
    %v1065 = vshrl.u32 %v1047, %v1063
    %v1066 = vor.u32 %v1064, %v1065
    %v1067 = vsub.s32 4294967266, %v1062
    %v1068 = vadd.s32 %v1067, 127
    %v1069 = vshll.u32 %v1068, 23
    %v1070 = vor.u32 4788187, %v1069
    %v1071 = vand.u32 2147483647, %v1070
    %v1073 = vcvt.s32.f32 %v1066
    %v1074 = vmul.f32 %v1073, %v1071
    %v1075 = vxor.u32 %v1074, 2147483648
    %v1076 = vsel %vm993, %v1075, %v1074
    %v1077 = vsub.s32 4, %v1053
    %v1078 = vsel %vm993, %v1077, %v1053
    %v1079 = vsel %vm992, %v56, %v1076
    %v1080 = vsel %vm992, 0, %v1078
    %v1081 = vcosq.f32.pop %v1079
    %v1082 = vsinq.f32.pop %v1079
    %vm1083 = vweird.f32 %v56
    %v1084 = vadd.s32 %v1080, 3
    %v1085 = vand.u32 %v1084, 3
    %vm1086 = vcmp.lt.s32.totalorder %v1085, 2
    %vm1087 = vcmp.eq.s32.totalorder %v1085, 0
    %v1088 = vxor.u32 %v1082, 2147483648
    %v1089 = vsel %vm1087, %v1081, %v1088
    %vm1090 = vcmp.eq.s32.totalorder %v1085, 2
    %v1091 = vxor.u32 %v1081, 2147483648
    %v1092 = vsel %vm1090, %v1091, %v1082
    %v1093 = vsel %vm1086, %v1089, %v1092
    %v1094 = vsel %vm1083, nan, %v1093
    %v1095 = vand.u32 2147483647, %v57
    %vm1096 = vcmp.le.f32.partialorder %v1095, 0.7853982
    %vm1097 = vcmp.lt.s32.totalorder %v57, 0
    %v1098 = vand.u32 %v57, 2139095040
    %v1099 = vshrl.u32 %v1098, 23
    %v1100 = vsub.s32 %v1099, 127
    %v1101 = vand.u32 2147483647, %v57
    %v1102 = vand.u32 %v1101, 8388607
    %v1103 = vor.u32 %v1102, 8388608
    %v1104 = vsub.s32 0, %v1103
    %v1105 = vadd.s32 %v1100, 1
    %vm1106 = vcmp.gt.s32.totalorder %v1105, 0
    %v1107 = vsel %vm1106, %v1105, 0
    %v1108 = vshrl.u32 %v1107, 5
    %v1109 = vand.u32 %v1107, 31
    %v1110 = vsub.s32 32, %v1109
    %v1111 = vshrl.u32 683565275, %v1110
    %v1112 = vshll.u32 683565275, %v1109
    %v1113 = vshrl.u32 2475754826, %v1110
    %v1114 = vor.u32 %v1112, %v1113
    %v1115 = vshll.u32 2475754826, %v1109
    %v1116 = vshrl.u32 2131351028, %v1110
    %v1117 = vor.u32 %v1115, %v1116
    %v1118 = vshll.u32 2131351028, %v1109
    %v1119 = vshrl.u32 2102212464, %v1110
    %v1120 = vor.u32 %v1118, %v1119
    %v1121 = vshll.u32 2102212464, %v1109
    %v1122 = vshrl.u32 920167782, %v1110
    %v1123 = vor.u32 %v1121, %v1122
    %v1124 = vshll.u32 920167782, %v1109
    %v1125 = vshrl.u32 1326507024, %v1110
    %v1126 = vor.u32 %v1124, %v1125
    %vm1127 = vcmp.lt.s32.totalorder %v1108, 1
    %vm1128 = vcmp.lt.s32.totalorder %v1108, 2
    %vm1129 = vcmp.lt.s32.totalorder %v1108, 3
    %vm1130 = vcmp.lt.s32.totalorder %v1108, 4
    %v1131 = vsel %vm1127, %v1111, %v1114
    %v1132 = vsel %vm1130, %v1120, 2102212464
    %v1133 = vsel %vm1129, %v1117, %v1132
    %v1134 = vsel %vm1128, %v1131, %v1133
    %v1135 = vsel %vm1127, %v1114, %v1117
    %v1136 = vsel %vm1130, %v1123, 920167782
    %v1137 = vsel %vm1129, %v1120, %v1136
    %v1138 = vsel %vm1128, %v1135, %v1137
    %v1139 = vsel %vm1127, %v1117, %v1120
    %v1140 = vsel %vm1130, %v1126, 1326507024
    %v1141 = vsel %vm1129, %v1123, %v1140
    %v1142 = vsel %vm1128, %v1139, %v1141
    %v1143 = vshll.u32 %v1103, 8
    %v1144 = vmul.u32.u64.compose %v1143, %v1142
    %v1145 = vextract.low.u32 %v1144
    %v1146 = vextract.high.u32 %v1144
    %v1147 = vmul.u32.u64.compose %v1143, %v1138
    %v1148 = vextract.low.u32 %v1147
    %v1149 = vextract.high.u32 %v1147
    %v1150 = vmul.u32 %v1143, %v1134
    %v1151 = vadd.s32 %v1146, %v1148
    %vm1152 = vc.u32 %v1146, %v1148
    %v1153 = vadd.s32 %v1149, 1
    %v1154 = vsel %vm1152, %v1153, %v1149
    %v1155 = vadd.s32 %v1150, %v1154
    %v1156 = vadd.s32 %v1155, 536870912
    %v1157 = vshrl.u32 %v1156, 30
    %v1158 = vshll.u32 %v1157, 30
    %v1159 = vsub.s32 %v1155, %v1158
    %vm1160 = vcmp.lt.s32.totalorder %v1159, 0
    %v1161 = vsub.s32 0, %v1159
    %v1162 = vsel %vm1160, %v1161, %v1159
    %v1163 = vclz %v1162
    %v1164 = vsub.s32 %v1163, 2
    %vm1165 = vcmp.gt.s32.totalorder 0, %v1164
    %v1166 = vsel %vm1165, 0, %v1164
    %v1167 = vsub.s32 32, %v1166
    %v1168 = vshll.u32 %v1159, %v1166
    %v1169 = vshrl.u32 %v1151, %v1167
    %v1170 = vor.u32 %v1168, %v1169
    %v1171 = vsub.s32 4294967266, %v1166
    %v1172 = vadd.s32 %v1171, 127
    %v1173 = vshll.u32 %v1172, 23
    %v1174 = vor.u32 4788187, %v1173
    %v1175 = vand.u32 2147483647, %v1174
    %v1177 = vcvt.s32.f32 %v1170
    %v1178 = vmul.f32 %v1177, %v1175
    %v1179 = vxor.u32 %v1178, 2147483648
    %v1180 = vsel %vm1097, %v1179, %v1178
    %v1181 = vsub.s32 4, %v1157
    %v1182 = vsel %vm1097, %v1181, %v1157
    %v1183 = vsel %vm1096, %v57, %v1180
    %v1184 = vsel %vm1096, 0, %v1182
    %v1185 = vcosq.f32.pop %v1183
    %v1186 = vsinq.f32.pop %v1183
    %vm1187 = vweird.f32 %v57
    %v1188 = vadd.s32 %v1184, 3
    %v1189 = vand.u32 %v1188, 3
    %vm1190 = vcmp.lt.s32.totalorder %v1189, 2
    %vm1191 = vcmp.eq.s32.totalorder %v1189, 0
    %v1192 = vxor.u32 %v1186, 2147483648
    %v1193 = vsel %vm1191, %v1185, %v1192
    %vm1194 = vcmp.eq.s32.totalorder %v1189, 2
    %v1195 = vxor.u32 %v1185, 2147483648
    %v1196 = vsel %vm1194, %v1195, %v1186
    %v1197 = vsel %vm1190, %v1193, %v1196
    %v1198 = vsel %vm1187, nan, %v1197
    %v1199 = vand.u32 2147483647, %v58
    %vm1200 = vcmp.le.f32.partialorder %v1199, 0.7853982
    %vm1201 = vcmp.lt.s32.totalorder %v58, 0
    %v1202 = vand.u32 %v58, 2139095040
    %v1203 = vshrl.u32 %v1202, 23
    %v1204 = vsub.s32 %v1203, 127
    %v1205 = vand.u32 2147483647, %v58
    %v1206 = vand.u32 %v1205, 8388607
    %v1207 = vor.u32 %v1206, 8388608
    %v1208 = vsub.s32 0, %v1207
    %v1209 = vadd.s32 %v1204, 1
    %vm1210 = vcmp.gt.s32.totalorder %v1209, 0
    %v1211 = vsel %vm1210, %v1209, 0
    %v1212 = vshrl.u32 %v1211, 5
    %v1213 = vand.u32 %v1211, 31
    %v1214 = vsub.s32 32, %v1213
    %v1215 = vshrl.u32 683565275, %v1214
    %v1216 = vshll.u32 683565275, %v1213
    %v1217 = vshrl.u32 2475754826, %v1214
    %v1218 = vor.u32 %v1216, %v1217
    %v1219 = vshll.u32 2475754826, %v1213
    %v1220 = vshrl.u32 2131351028, %v1214
    %v1221 = vor.u32 %v1219, %v1220
    %v1222 = vshll.u32 2131351028, %v1213
    %v1223 = vshrl.u32 2102212464, %v1214
    %v1224 = vor.u32 %v1222, %v1223
    %v1225 = vshll.u32 2102212464, %v1213
    %v1226 = vshrl.u32 920167782, %v1214
    %v1227 = vor.u32 %v1225, %v1226
    %v1228 = vshll.u32 920167782, %v1213
    %v1229 = vshrl.u32 1326507024, %v1214
    %v1230 = vor.u32 %v1228, %v1229
    %vm1231 = vcmp.lt.s32.totalorder %v1212, 1
    %vm1232 = vcmp.lt.s32.totalorder %v1212, 2
    %vm1233 = vcmp.lt.s32.totalorder %v1212, 3
    %vm1234 = vcmp.lt.s32.totalorder %v1212, 4
    %v1235 = vsel %vm1231, %v1215, %v1218
    %v1236 = vsel %vm1234, %v1224, 2102212464
    %v1237 = vsel %vm1233, %v1221, %v1236
    %v1238 = vsel %vm1232, %v1235, %v1237
    %v1239 = vsel %vm1231, %v1218, %v1221
    %v1240 = vsel %vm1234, %v1227, 920167782
    %v1241 = vsel %vm1233, %v1224, %v1240
    %v1242 = vsel %vm1232, %v1239, %v1241
    %v1243 = vsel %vm1231, %v1221, %v1224
    %v1244 = vsel %vm1234, %v1230, 1326507024
    %v1245 = vsel %vm1233, %v1227, %v1244
    %v1246 = vsel %vm1232, %v1243, %v1245
    %v1247 = vshll.u32 %v1207, 8
    %v1248 = vmul.u32.u64.compose %v1247, %v1246
    %v1249 = vextract.low.u32 %v1248
    %v1250 = vextract.high.u32 %v1248
    %v1251 = vmul.u32.u64.compose %v1247, %v1242
    %v1252 = vextract.low.u32 %v1251
    %v1253 = vextract.high.u32 %v1251
    %v1254 = vmul.u32 %v1247, %v1238
    %v1255 = vadd.s32 %v1250, %v1252
    %vm1256 = vc.u32 %v1250, %v1252
    %v1257 = vadd.s32 %v1253, 1
    %v1258 = vsel %vm1256, %v1257, %v1253
    %v1259 = vadd.s32 %v1254, %v1258
    %v1260 = vadd.s32 %v1259, 536870912
    %v1261 = vshrl.u32 %v1260, 30
    %v1262 = vshll.u32 %v1261, 30
    %v1263 = vsub.s32 %v1259, %v1262
    %vm1264 = vcmp.lt.s32.totalorder %v1263, 0
    %v1265 = vsub.s32 0, %v1263
    %v1266 = vsel %vm1264, %v1265, %v1263
    %v1267 = vclz %v1266
    %v1268 = vsub.s32 %v1267, 2
    %vm1269 = vcmp.gt.s32.totalorder 0, %v1268
    %v1270 = vsel %vm1269, 0, %v1268
    %v1271 = vsub.s32 32, %v1270
    %v1272 = vshll.u32 %v1263, %v1270
    %v1273 = vshrl.u32 %v1255, %v1271
    %v1274 = vor.u32 %v1272, %v1273
    %v1275 = vsub.s32 4294967266, %v1270
    %v1276 = vadd.s32 %v1275, 127
    %v1277 = vshll.u32 %v1276, 23
    %v1278 = vor.u32 4788187, %v1277
    %v1279 = vand.u32 2147483647, %v1278
    %v1281 = vcvt.s32.f32 %v1274
    %v1282 = vmul.f32 %v1281, %v1279
    %v1283 = vxor.u32 %v1282, 2147483648
    %v1284 = vsel %vm1201, %v1283, %v1282
    %v1285 = vsub.s32 4, %v1261
    %v1286 = vsel %vm1201, %v1285, %v1261
    %v1287 = vsel %vm1200, %v58, %v1284
    %v1288 = vsel %vm1200, 0, %v1286
    %v1289 = vcosq.f32.pop %v1287
    %v1290 = vsinq.f32.pop %v1287
    %vm1291 = vweird.f32 %v58
    %v1292 = vadd.s32 %v1288, 3
    %v1293 = vand.u32 %v1292, 3
    %vm1294 = vcmp.lt.s32.totalorder %v1293, 2
    %vm1295 = vcmp.eq.s32.totalorder %v1293, 0
    %v1296 = vxor.u32 %v1290, 2147483648
    %v1297 = vsel %vm1295, %v1289, %v1296
    %vm1298 = vcmp.eq.s32.totalorder %v1293, 2
    %v1299 = vxor.u32 %v1289, 2147483648
    %v1300 = vsel %vm1298, %v1299, %v1290
    %v1301 = vsel %vm1294, %v1297, %v1300
    %v1302 = vsel %vm1291, nan, %v1301
    %v1303 = vand.u32 2147483647, %v59
    %vm1304 = vcmp.le.f32.partialorder %v1303, 0.7853982
    %vm1305 = vcmp.lt.s32.totalorder %v59, 0
    %v1306 = vand.u32 %v59, 2139095040
    %v1307 = vshrl.u32 %v1306, 23
    %v1308 = vsub.s32 %v1307, 127
    %v1309 = vand.u32 2147483647, %v59
    %v1310 = vand.u32 %v1309, 8388607
    %v1311 = vor.u32 %v1310, 8388608
    %v1312 = vsub.s32 0, %v1311
    %v1313 = vadd.s32 %v1308, 1
    %vm1314 = vcmp.gt.s32.totalorder %v1313, 0
    %v1315 = vsel %vm1314, %v1313, 0
    %v1316 = vshrl.u32 %v1315, 5
    %v1317 = vand.u32 %v1315, 31
    %v1318 = vsub.s32 32, %v1317
    %v1319 = vshrl.u32 683565275, %v1318
    %v1320 = vshll.u32 683565275, %v1317
    %v1321 = vshrl.u32 2475754826, %v1318
    %v1322 = vor.u32 %v1320, %v1321
    %v1323 = vshll.u32 2475754826, %v1317
    %v1324 = vshrl.u32 2131351028, %v1318
    %v1325 = vor.u32 %v1323, %v1324
    %v1326 = vshll.u32 2131351028, %v1317
    %v1327 = vshrl.u32 2102212464, %v1318
    %v1328 = vor.u32 %v1326, %v1327
    %v1329 = vshll.u32 2102212464, %v1317
    %v1330 = vshrl.u32 920167782, %v1318
    %v1331 = vor.u32 %v1329, %v1330
    %v1332 = vshll.u32 920167782, %v1317
    %v1333 = vshrl.u32 1326507024, %v1318
    %v1334 = vor.u32 %v1332, %v1333
    %vm1335 = vcmp.lt.s32.totalorder %v1316, 1
    %vm1336 = vcmp.lt.s32.totalorder %v1316, 2
    %vm1337 = vcmp.lt.s32.totalorder %v1316, 3
    %vm1338 = vcmp.lt.s32.totalorder %v1316, 4
    %v1339 = vsel %vm1335, %v1319, %v1322
    %v1340 = vsel %vm1338, %v1328, 2102212464
    %v1341 = vsel %vm1337, %v1325, %v1340
    %v1342 = vsel %vm1336, %v1339, %v1341
    %v1343 = vsel %vm1335, %v1322, %v1325
    %v1344 = vsel %vm1338, %v1331, 920167782
    %v1345 = vsel %vm1337, %v1328, %v1344
    %v1346 = vsel %vm1336, %v1343, %v1345
    %v1347 = vsel %vm1335, %v1325, %v1328
    %v1348 = vsel %vm1338, %v1334, 1326507024
    %v1349 = vsel %vm1337, %v1331, %v1348
    %v1350 = vsel %vm1336, %v1347, %v1349
    %v1351 = vshll.u32 %v1311, 8
    %v1352 = vmul.u32.u64.compose %v1351, %v1350
    %v1353 = vextract.low.u32 %v1352
    %v1354 = vextract.high.u32 %v1352
    %v1355 = vmul.u32.u64.compose %v1351, %v1346
    %v1356 = vextract.low.u32 %v1355
    %v1357 = vextract.high.u32 %v1355
    %v1358 = vmul.u32 %v1351, %v1342
    %v1359 = vadd.s32 %v1354, %v1356
    %vm1360 = vc.u32 %v1354, %v1356
    %v1361 = vadd.s32 %v1357, 1
    %v1362 = vsel %vm1360, %v1361, %v1357
    %v1363 = vadd.s32 %v1358, %v1362
    %v1364 = vadd.s32 %v1363, 536870912
    %v1365 = vshrl.u32 %v1364, 30
    %v1366 = vshll.u32 %v1365, 30
    %v1367 = vsub.s32 %v1363, %v1366
    %vm1368 = vcmp.lt.s32.totalorder %v1367, 0
    %v1369 = vsub.s32 0, %v1367
    %v1370 = vsel %vm1368, %v1369, %v1367
    %v1371 = vclz %v1370
    %v1372 = vsub.s32 %v1371, 2
    %vm1373 = vcmp.gt.s32.totalorder 0, %v1372
    %v1374 = vsel %vm1373, 0, %v1372
    %v1375 = vsub.s32 32, %v1374
    %v1376 = vshll.u32 %v1367, %v1374
    %v1377 = vshrl.u32 %v1359, %v1375
    %v1378 = vor.u32 %v1376, %v1377
    %v1379 = vsub.s32 4294967266, %v1374
    %v1380 = vadd.s32 %v1379, 127
    %v1381 = vshll.u32 %v1380, 23
    %v1382 = vor.u32 4788187, %v1381
    %v1383 = vand.u32 2147483647, %v1382
    %v1385 = vcvt.s32.f32 %v1378
    %v1386 = vmul.f32 %v1385, %v1383
    %v1387 = vxor.u32 %v1386, 2147483648
    %v1388 = vsel %vm1305, %v1387, %v1386
    %v1389 = vsub.s32 4, %v1365
    %v1390 = vsel %vm1305, %v1389, %v1365
    %v1391 = vsel %vm1304, %v59, %v1388
    %v1392 = vsel %vm1304, 0, %v1390
    %v1393 = vcosq.f32.pop %v1391
    %v1394 = vsinq.f32.pop %v1391
    %vm1395 = vweird.f32 %v59
    %v1396 = vadd.s32 %v1392, 3
    %v1397 = vand.u32 %v1396, 3
    %vm1398 = vcmp.lt.s32.totalorder %v1397, 2
    %vm1399 = vcmp.eq.s32.totalorder %v1397, 0
    %v1400 = vxor.u32 %v1394, 2147483648
    %v1401 = vsel %vm1399, %v1393, %v1400
    %vm1402 = vcmp.eq.s32.totalorder %v1397, 2
    %v1403 = vxor.u32 %v1393, 2147483648
    %v1404 = vsel %vm1402, %v1403, %v1394
    %v1405 = vsel %vm1398, %v1401, %v1404
    %v1406 = vsel %vm1395, nan, %v1405
    %v1407 = vand.u32 2147483647, %v60
    %vm1408 = vcmp.le.f32.partialorder %v1407, 0.7853982
    %vm1409 = vcmp.lt.s32.totalorder %v60, 0
    %v1410 = vand.u32 %v60, 2139095040
    %v1411 = vshrl.u32 %v1410, 23
    %v1412 = vsub.s32 %v1411, 127
    %v1413 = vand.u32 2147483647, %v60
    %v1414 = vand.u32 %v1413, 8388607
    %v1415 = vor.u32 %v1414, 8388608
    %v1416 = vsub.s32 0, %v1415
    %v1417 = vadd.s32 %v1412, 1
    %vm1418 = vcmp.gt.s32.totalorder %v1417, 0
    %v1419 = vsel %vm1418, %v1417, 0
    %v1420 = vshrl.u32 %v1419, 5
    %v1421 = vand.u32 %v1419, 31
    %v1422 = vsub.s32 32, %v1421
    %v1423 = vshrl.u32 683565275, %v1422
    %v1424 = vshll.u32 683565275, %v1421
    %v1425 = vshrl.u32 2475754826, %v1422
    %v1426 = vor.u32 %v1424, %v1425
    %v1427 = vshll.u32 2475754826, %v1421
    %v1428 = vshrl.u32 2131351028, %v1422
    %v1429 = vor.u32 %v1427, %v1428
    %v1430 = vshll.u32 2131351028, %v1421
    %v1431 = vshrl.u32 2102212464, %v1422
    %v1432 = vor.u32 %v1430, %v1431
    %v1433 = vshll.u32 2102212464, %v1421
    %v1434 = vshrl.u32 920167782, %v1422
    %v1435 = vor.u32 %v1433, %v1434
    %v1436 = vshll.u32 920167782, %v1421
    %v1437 = vshrl.u32 1326507024, %v1422
    %v1438 = vor.u32 %v1436, %v1437
    %vm1439 = vcmp.lt.s32.totalorder %v1420, 1
    %vm1440 = vcmp.lt.s32.totalorder %v1420, 2
    %vm1441 = vcmp.lt.s32.totalorder %v1420, 3
    %vm1442 = vcmp.lt.s32.totalorder %v1420, 4
    %v1443 = vsel %vm1439, %v1423, %v1426
    %v1444 = vsel %vm1442, %v1432, 2102212464
    %v1445 = vsel %vm1441, %v1429, %v1444
    %v1446 = vsel %vm1440, %v1443, %v1445
    %v1447 = vsel %vm1439, %v1426, %v1429
    %v1448 = vsel %vm1442, %v1435, 920167782
    %v1449 = vsel %vm1441, %v1432, %v1448
    %v1450 = vsel %vm1440, %v1447, %v1449
    %v1451 = vsel %vm1439, %v1429, %v1432
    %v1452 = vsel %vm1442, %v1438, 1326507024
    %v1453 = vsel %vm1441, %v1435, %v1452
    %v1454 = vsel %vm1440, %v1451, %v1453
    %v1455 = vshll.u32 %v1415, 8
    %v1456 = vmul.u32.u64.compose %v1455, %v1454
    %v1457 = vextract.low.u32 %v1456
    %v1458 = vextract.high.u32 %v1456
    %v1459 = vmul.u32.u64.compose %v1455, %v1450
    %v1460 = vextract.low.u32 %v1459
    %v1461 = vextract.high.u32 %v1459
    %v1462 = vmul.u32 %v1455, %v1446
    %v1463 = vadd.s32 %v1458, %v1460
    %vm1464 = vc.u32 %v1458, %v1460
    %v1465 = vadd.s32 %v1461, 1
    %v1466 = vsel %vm1464, %v1465, %v1461
    %v1467 = vadd.s32 %v1462, %v1466
    %v1468 = vadd.s32 %v1467, 536870912
    %v1469 = vshrl.u32 %v1468, 30
    %v1470 = vshll.u32 %v1469, 30
    %v1471 = vsub.s32 %v1467, %v1470
    %vm1472 = vcmp.lt.s32.totalorder %v1471, 0
    %v1473 = vsub.s32 0, %v1471
    %v1474 = vsel %vm1472, %v1473, %v1471
    %v1475 = vclz %v1474
    %v1476 = vsub.s32 %v1475, 2
    %vm1477 = vcmp.gt.s32.totalorder 0, %v1476
    %v1478 = vsel %vm1477, 0, %v1476
    %v1479 = vsub.s32 32, %v1478
    %v1480 = vshll.u32 %v1471, %v1478
    %v1481 = vshrl.u32 %v1463, %v1479
    %v1482 = vor.u32 %v1480, %v1481
    %v1483 = vsub.s32 4294967266, %v1478
    %v1484 = vadd.s32 %v1483, 127
    %v1485 = vshll.u32 %v1484, 23
    %v1486 = vor.u32 4788187, %v1485
    %v1487 = vand.u32 2147483647, %v1486
    %v1489 = vcvt.s32.f32 %v1482
    %v1490 = vmul.f32 %v1489, %v1487
    %v1491 = vxor.u32 %v1490, 2147483648
    %v1492 = vsel %vm1409, %v1491, %v1490
    %v1493 = vsub.s32 4, %v1469
    %v1494 = vsel %vm1409, %v1493, %v1469
    %v1495 = vsel %vm1408, %v60, %v1492
    %v1496 = vsel %vm1408, 0, %v1494
    %v1497 = vcosq.f32.pop %v1495
    %v1498 = vsinq.f32.pop %v1495
    %vm1499 = vweird.f32 %v60
    %v1500 = vadd.s32 %v1496, 3
    %v1501 = vand.u32 %v1500, 3
    %vm1502 = vcmp.lt.s32.totalorder %v1501, 2
    %vm1503 = vcmp.eq.s32.totalorder %v1501, 0
    %v1504 = vxor.u32 %v1498, 2147483648
    %v1505 = vsel %vm1503, %v1497, %v1504
    %vm1506 = vcmp.eq.s32.totalorder %v1501, 2
    %v1507 = vxor.u32 %v1497, 2147483648
    %v1508 = vsel %vm1506, %v1507, %v1498
    %v1509 = vsel %vm1502, %v1505, %v1508
    %v1510 = vsel %vm1499, nan, %v1509
    %v1511 = vand.u32 2147483647, %v61
    %vm1512 = vcmp.le.f32.partialorder %v1511, 0.7853982
    %vm1513 = vcmp.lt.s32.totalorder %v61, 0
    %v1514 = vand.u32 %v61, 2139095040
    %v1515 = vshrl.u32 %v1514, 23
    %v1516 = vsub.s32 %v1515, 127
    %v1517 = vand.u32 2147483647, %v61
    %v1518 = vand.u32 %v1517, 8388607
    %v1519 = vor.u32 %v1518, 8388608
    %v1520 = vsub.s32 0, %v1519
    %v1521 = vadd.s32 %v1516, 1
    %vm1522 = vcmp.gt.s32.totalorder %v1521, 0
    %v1523 = vsel %vm1522, %v1521, 0
    %v1524 = vshrl.u32 %v1523, 5
    %v1525 = vand.u32 %v1523, 31
    %v1526 = vsub.s32 32, %v1525
    %v1527 = vshrl.u32 683565275, %v1526
    %v1528 = vshll.u32 683565275, %v1525
    %v1529 = vshrl.u32 2475754826, %v1526
    %v1530 = vor.u32 %v1528, %v1529
    %v1531 = vshll.u32 2475754826, %v1525
    %v1532 = vshrl.u32 2131351028, %v1526
    %v1533 = vor.u32 %v1531, %v1532
    %v1534 = vshll.u32 2131351028, %v1525
    %v1535 = vshrl.u32 2102212464, %v1526
    %v1536 = vor.u32 %v1534, %v1535
    %v1537 = vshll.u32 2102212464, %v1525
    %v1538 = vshrl.u32 920167782, %v1526
    %v1539 = vor.u32 %v1537, %v1538
    %v1540 = vshll.u32 920167782, %v1525
    %v1541 = vshrl.u32 1326507024, %v1526
    %v1542 = vor.u32 %v1540, %v1541
    %vm1543 = vcmp.lt.s32.totalorder %v1524, 1
    %vm1544 = vcmp.lt.s32.totalorder %v1524, 2
    %vm1545 = vcmp.lt.s32.totalorder %v1524, 3
    %vm1546 = vcmp.lt.s32.totalorder %v1524, 4
    %v1547 = vsel %vm1543, %v1527, %v1530
    %v1548 = vsel %vm1546, %v1536, 2102212464
    %v1549 = vsel %vm1545, %v1533, %v1548
    %v1550 = vsel %vm1544, %v1547, %v1549
    %v1551 = vsel %vm1543, %v1530, %v1533
    %v1552 = vsel %vm1546, %v1539, 920167782
    %v1553 = vsel %vm1545, %v1536, %v1552
    %v1554 = vsel %vm1544, %v1551, %v1553
    %v1555 = vsel %vm1543, %v1533, %v1536
    %v1556 = vsel %vm1546, %v1542, 1326507024
    %v1557 = vsel %vm1545, %v1539, %v1556
    %v1558 = vsel %vm1544, %v1555, %v1557
    %v1559 = vshll.u32 %v1519, 8
    %v1560 = vmul.u32.u64.compose %v1559, %v1558
    %v1561 = vextract.low.u32 %v1560
    %v1562 = vextract.high.u32 %v1560
    %v1563 = vmul.u32.u64.compose %v1559, %v1554
    %v1564 = vextract.low.u32 %v1563
    %v1565 = vextract.high.u32 %v1563
    %v1566 = vmul.u32 %v1559, %v1550
    %v1567 = vadd.s32 %v1562, %v1564
    %vm1568 = vc.u32 %v1562, %v1564
    %v1569 = vadd.s32 %v1565, 1
    %v1570 = vsel %vm1568, %v1569, %v1565
    %v1571 = vadd.s32 %v1566, %v1570
    %v1572 = vadd.s32 %v1571, 536870912
    %v1573 = vshrl.u32 %v1572, 30
    %v1574 = vshll.u32 %v1573, 30
    %v1575 = vsub.s32 %v1571, %v1574
    %vm1576 = vcmp.lt.s32.totalorder %v1575, 0
    %v1577 = vsub.s32 0, %v1575
    %v1578 = vsel %vm1576, %v1577, %v1575
    %v1579 = vclz %v1578
    %v1580 = vsub.s32 %v1579, 2
    %vm1581 = vcmp.gt.s32.totalorder 0, %v1580
    %v1582 = vsel %vm1581, 0, %v1580
    %v1583 = vsub.s32 32, %v1582
    %v1584 = vshll.u32 %v1575, %v1582
    %v1585 = vshrl.u32 %v1567, %v1583
    %v1586 = vor.u32 %v1584, %v1585
    %v1587 = vsub.s32 4294967266, %v1582
    %v1588 = vadd.s32 %v1587, 127
    %v1589 = vshll.u32 %v1588, 23
    %v1590 = vor.u32 4788187, %v1589
    %v1591 = vand.u32 2147483647, %v1590
    %v1593 = vcvt.s32.f32 %v1586
    %v1594 = vmul.f32 %v1593, %v1591
    %v1595 = vxor.u32 %v1594, 2147483648
    %v1596 = vsel %vm1513, %v1595, %v1594
    %v1597 = vsub.s32 4, %v1573
    %v1598 = vsel %vm1513, %v1597, %v1573
    %v1599 = vsel %vm1512, %v61, %v1596
    %v1600 = vsel %vm1512, 0, %v1598
    %v1601 = vcosq.f32.pop %v1599
    %v1602 = vsinq.f32.pop %v1599
    %vm1603 = vweird.f32 %v61
    %v1604 = vadd.s32 %v1600, 3
    %v1605 = vand.u32 %v1604, 3
    %vm1606 = vcmp.lt.s32.totalorder %v1605, 2
    %vm1607 = vcmp.eq.s32.totalorder %v1605, 0
    %v1608 = vxor.u32 %v1602, 2147483648
    %v1609 = vsel %vm1607, %v1601, %v1608
    %vm1610 = vcmp.eq.s32.totalorder %v1605, 2
    %v1611 = vxor.u32 %v1601, 2147483648
    %v1612 = vsel %vm1610, %v1611, %v1602
    %v1613 = vsel %vm1606, %v1609, %v1612
    %v1614 = vsel %vm1603, nan, %v1613
    %v1615 = vand.u32 2147483647, %v62
    %vm1616 = vcmp.le.f32.partialorder %v1615, 0.7853982
    %vm1617 = vcmp.lt.s32.totalorder %v62, 0
    %v1618 = vand.u32 %v62, 2139095040
    %v1619 = vshrl.u32 %v1618, 23
    %v1620 = vsub.s32 %v1619, 127
    %v1621 = vand.u32 2147483647, %v62
    %v1622 = vand.u32 %v1621, 8388607
    %v1623 = vor.u32 %v1622, 8388608
    %v1624 = vsub.s32 0, %v1623
    %v1625 = vadd.s32 %v1620, 1
    %vm1626 = vcmp.gt.s32.totalorder %v1625, 0
    %v1627 = vsel %vm1626, %v1625, 0
    %v1628 = vshrl.u32 %v1627, 5
    %v1629 = vand.u32 %v1627, 31
    %v1630 = vsub.s32 32, %v1629
    %v1631 = vshrl.u32 683565275, %v1630
    %v1632 = vshll.u32 683565275, %v1629
    %v1633 = vshrl.u32 2475754826, %v1630
    %v1634 = vor.u32 %v1632, %v1633
    %v1635 = vshll.u32 2475754826, %v1629
    %v1636 = vshrl.u32 2131351028, %v1630
    %v1637 = vor.u32 %v1635, %v1636
    %v1638 = vshll.u32 2131351028, %v1629
    %v1639 = vshrl.u32 2102212464, %v1630
    %v1640 = vor.u32 %v1638, %v1639
    %v1641 = vshll.u32 2102212464, %v1629
    %v1642 = vshrl.u32 920167782, %v1630
    %v1643 = vor.u32 %v1641, %v1642
    %v1644 = vshll.u32 920167782, %v1629
    %v1645 = vshrl.u32 1326507024, %v1630
    %v1646 = vor.u32 %v1644, %v1645
    %vm1647 = vcmp.lt.s32.totalorder %v1628, 1
    %vm1648 = vcmp.lt.s32.totalorder %v1628, 2
    %vm1649 = vcmp.lt.s32.totalorder %v1628, 3
    %vm1650 = vcmp.lt.s32.totalorder %v1628, 4
    %v1651 = vsel %vm1647, %v1631, %v1634
    %v1652 = vsel %vm1650, %v1640, 2102212464
    %v1653 = vsel %vm1649, %v1637, %v1652
    %v1654 = vsel %vm1648, %v1651, %v1653
    %v1655 = vsel %vm1647, %v1634, %v1637
    %v1656 = vsel %vm1650, %v1643, 920167782
    %v1657 = vsel %vm1649, %v1640, %v1656
    %v1658 = vsel %vm1648, %v1655, %v1657
    %v1659 = vsel %vm1647, %v1637, %v1640
    %v1660 = vsel %vm1650, %v1646, 1326507024
    %v1661 = vsel %vm1649, %v1643, %v1660
    %v1662 = vsel %vm1648, %v1659, %v1661
    %v1663 = vshll.u32 %v1623, 8
    %v1664 = vmul.u32.u64.compose %v1663, %v1662
    %v1665 = vextract.low.u32 %v1664
    %v1666 = vextract.high.u32 %v1664
    %v1667 = vmul.u32.u64.compose %v1663, %v1658
    %v1668 = vextract.low.u32 %v1667
    %v1669 = vextract.high.u32 %v1667
    %v1670 = vmul.u32 %v1663, %v1654
    %v1671 = vadd.s32 %v1666, %v1668
    %vm1672 = vc.u32 %v1666, %v1668
    %v1673 = vadd.s32 %v1669, 1
    %v1674 = vsel %vm1672, %v1673, %v1669
    %v1675 = vadd.s32 %v1670, %v1674
    %v1676 = vadd.s32 %v1675, 536870912
    %v1677 = vshrl.u32 %v1676, 30
    %v1678 = vshll.u32 %v1677, 30
    %v1679 = vsub.s32 %v1675, %v1678
    %vm1680 = vcmp.lt.s32.totalorder %v1679, 0
    %v1681 = vsub.s32 0, %v1679
    %v1682 = vsel %vm1680, %v1681, %v1679
    %v1683 = vclz %v1682
    %v1684 = vsub.s32 %v1683, 2
    %vm1685 = vcmp.gt.s32.totalorder 0, %v1684
    %v1686 = vsel %vm1685, 0, %v1684
    %v1687 = vsub.s32 32, %v1686
    %v1688 = vshll.u32 %v1679, %v1686
    %v1689 = vshrl.u32 %v1671, %v1687
    %v1690 = vor.u32 %v1688, %v1689
    %v1691 = vsub.s32 4294967266, %v1686
    %v1692 = vadd.s32 %v1691, 127
    %v1693 = vshll.u32 %v1692, 23
    %v1694 = vor.u32 4788187, %v1693
    %v1695 = vand.u32 2147483647, %v1694
    %v1697 = vcvt.s32.f32 %v1690
    %v1698 = vmul.f32 %v1697, %v1695
    %v1699 = vxor.u32 %v1698, 2147483648
    %v1700 = vsel %vm1617, %v1699, %v1698
    %v1701 = vsub.s32 4, %v1677
    %v1702 = vsel %vm1617, %v1701, %v1677
    %v1703 = vsel %vm1616, %v62, %v1700
    %v1704 = vsel %vm1616, 0, %v1702
    %v1705 = vcosq.f32.pop %v1703
    %v1706 = vsinq.f32.pop %v1703
    %vm1707 = vweird.f32 %v62
    %v1708 = vadd.s32 %v1704, 3
    %v1709 = vand.u32 %v1708, 3
    %vm1710 = vcmp.lt.s32.totalorder %v1709, 2
    %vm1711 = vcmp.eq.s32.totalorder %v1709, 0
    %v1712 = vxor.u32 %v1706, 2147483648
    %v1713 = vsel %vm1711, %v1705, %v1712
    %vm1714 = vcmp.eq.s32.totalorder %v1709, 2
    %v1715 = vxor.u32 %v1705, 2147483648
    %v1716 = vsel %vm1714, %v1715, %v1706
    %v1717 = vsel %vm1710, %v1713, %v1716
    %v1718 = vsel %vm1707, nan, %v1717
    %1727 = vrot.lane.b32.xlu0 %v165, 4
    %v1728 = vpop.permute.xlu0 %1727
    %1729 = vrot.lane.b32.xlu0 %v268, 4
    %v1730 = vpop.permute.xlu0 %1729
    %1731 = vrot.lane.b32.xlu0 %v371, 4
    %v1732 = vpop.permute.xlu0 %1731
    %1733 = vrot.lane.b32.xlu0 %v474, 4
    %v1734 = vpop.permute.xlu0 %1733
    %1735 = vrot.lane.b32.xlu0 %v577, 4
    %v1736 = vpop.permute.xlu0 %1735
    %1737 = vrot.lane.b32.xlu0 %v680, 4
    %v1738 = vpop.permute.xlu0 %1737
    %1739 = vrot.lane.b32.xlu0 %v783, 4
    %v1740 = vpop.permute.xlu0 %1739
    %1741 = vrot.lane.b32.xlu0 %v886, 4
    %v1742 = vpop.permute.xlu0 %1741
    %1759 = vrot.lane.b32.xlu0 %v990, 8
    %v1760 = vpop.permute.xlu0 %1759
    %1761 = vrot.lane.b32.xlu0 %v1094, 8
    %v1762 = vpop.permute.xlu0 %1761
    %1763 = vrot.lane.b32.xlu0 %v1198, 8
    %v1764 = vpop.permute.xlu0 %1763
    %1765 = vrot.lane.b32.xlu0 %v1302, 8
    %v1766 = vpop.permute.xlu0 %1765
    %1767 = vrot.lane.b32.xlu0 %v1406, 8
    %v1768 = vpop.permute.xlu0 %1767
    %1769 = vrot.lane.b32.xlu0 %v1510, 8
    %v1770 = vpop.permute.xlu0 %1769
    %1771 = vrot.lane.b32.xlu0 %v1614, 8
    %v1772 = vpop.permute.xlu0 %1771
    %1773 = vrot.lane.b32.xlu0 %v1718, 8
    %v1774 = vpop.permute.xlu0 %1773
    %1783 = vrot.lane.b32.xlu0 %v990, 12
    %v1784 = vpop.permute.xlu0 %1783
    %1785 = vrot.lane.b32.xlu0 %v1094, 12
    %v1786 = vpop.permute.xlu0 %1785
    %1787 = vrot.lane.b32.xlu0 %v1198, 12
    %v1788 = vpop.permute.xlu0 %1787
    %1789 = vrot.lane.b32.xlu0 %v1302, 12
    %v1790 = vpop.permute.xlu0 %1789
    %1791 = vrot.lane.b32.xlu0 %v1406, 12
    %v1792 = vpop.permute.xlu0 %1791
    %1793 = vrot.lane.b32.xlu0 %v1510, 12
    %v1794 = vpop.permute.xlu0 %1793
    %1795 = vrot.lane.b32.xlu0 %v1614, 12
    %v1796 = vpop.permute.xlu0 %1795
    %1797 = vrot.lane.b32.xlu0 %v1718, 12
    %v1798 = vpop.permute.xlu0 %1797
    %vm1807 = vcmask 31744
    %v1808 = vsel %vm1807, %v165, %v1728
    %v1809 = vsel %vm1807, %v268, %v1730
    %v1810 = vsel %vm1807, %v371, %v1732
    %v1811 = vsel %vm1807, %v474, %v1734
    %v1812 = vsel %vm1807, %v577, %v1736
    %v1813 = vsel %vm1807, %v680, %v1738
    %v1814 = vsel %vm1807, %v783, %v1740
    %v1815 = vsel %vm1807, %v886, %v1742
    %vm1816 = vcmask 64512
    %v1817 = vsel %vm1816, %v1808, %v1760
    %v1818 = vsel %vm1816, %v1809, %v1762
    %v1819 = vsel %vm1816, %v1810, %v1764
    %v1820 = vsel %vm1816, %v1811, %v1766
    %v1821 = vsel %vm1816, %v1812, %v1768
    %v1822 = vsel %vm1816, %v1813, %v1770
    %v1823 = vsel %vm1816, %v1814, %v1772
    %v1824 = vsel %vm1816, %v1815, %v1774
    %vm1825 = vcmask 97280
    %v1826 = vsel %vm1825, %v1817, %v1784
    %v1827 = vsel %vm1825, %v1818, %v1786
    %v1828 = vsel %vm1825, %v1819, %v1788
    %v1829 = vsel %vm1825, %v1820, %v1790
    %v1830 = vsel %vm1825, %v1821, %v1792
    %v1831 = vsel %vm1825, %v1822, %v1794
    %v1832 = vsel %vm1825, %v1823, %v1796
    %v1833 = vsel %vm1825, %v1824, %v1798
    %vm1834 = vcmask 130048
    %1835 = vst.msk [vmem:[%s1] sm:$0xff] %vm1834, %v1826
    %1836 = vst.msk [vmem:[%s1 + $0x8] sm:$0xff] %vm1834, %v1827
    %1837 = vst.msk [vmem:[%s1 + $0x10] sm:$0xff] %vm1834, %v1828
    %1838 = vst.msk [vmem:[%s1 + $0x18] sm:$0xff] %vm1834, %v1829
    %1839 = vst.msk [vmem:[%s1 + $0x20] sm:$0xff] %vm1834, %v1830
    %1840 = vst.msk [vmem:[%s1 + $0x28] sm:$0xff] %vm1834, %v1831
    %1841 = vst.msk [vmem:[%s1 + $0x30] sm:$0xff] %vm1834, %v1832
    %1842 = vst.msk [vmem:[%s1 + $0x38] sm:$0xff] %vm1834, %v1833
    // Predicated region
    $region10: #{_rope_cache_pallas.1} parent=1 // pred_check
      _
    $region11: #{_rope_cache_pallas.1} parent=1 // pred_check_branch
      %1844 = sbr.rel (0) target = $region13
    $region12: #{_rope_cache_pallas.1} parent=1 // pred_region
      _
    $region13: #{_rope_cache_pallas.1} parent=1 // pred_fallthru
      _
    // Predicated region
    $region14: #{_rope_cache_pallas.1} parent=1 // pred_check
      _
    $region15: #{_rope_cache_pallas.1} parent=1 // pred_check_branch
      %1846 = sbr.rel (0) target = $region17
    $region16: #{_rope_cache_pallas.1} parent=1 // pred_region
      _
    $region17: #{_rope_cache_pallas.1} parent=1 // pred_fallthru
      _
    %1847 = vsyncpa [#allocation3], 1

</llo_original>
